<compile_context>
chip_gen: v6e
topology: v6e:2x2x1
jax: 0.10.0
libtpu: 0.0.40
codegen_flags: <defaults>
</compile_context>

<pallas_src>
import math
import numpy as np
import jax
import jax.numpy as jnp
from jax.experimental import pallas as pl
from jax.experimental.pallas import tpu as pltpu


# ---------------- model dimensions (small, consistent with the module) -------
B = 2          # batch
S = 8          # sequence length
D = 32         # input_dim / features_dim
HID = 64       # output_dim (feed-forward hidden)
H = 4          # attn_heads
HD = D // H    # heads_dim
BS = B * S     # flattened rows
LN_EPS = 1e-5


def _gelu(x):
    # 0.5 * x * (1 + tanh(0.7978845608 * (x + 0.044715 * x^3)))
    return 0.5 * x * (1.0 + jnp.tanh(0.7978845608 * (x + 0.044715 * x * x * x)))


def _layer_norm(v, w, b):
    mu = jnp.mean(v, axis=-1, keepdims=True)
    var = jnp.mean((v - mu) ** 2, axis=-1, keepdims=True)
    return (v - mu) * jax.lax.rsqrt(var + LN_EPS) * w + b


def transformer_block_kernel(
    x_ref,            # (B*S, D)  f32
    bias_ref,         # (B, S, S) f32: +inf on kept keys, -1e32 on masked keys
    wqkv_ref, bqkv_ref,   # (D, 3D), (1, 3D)   (Wq already scaled by 1/sqrt(HD))
    wo_ref, bo_ref,       # (D, D), (1, D)
    ln1w_ref, ln1b_ref,   # (1, D)
    w1_ref, b1_ref,       # (D, HID), (1, HID)
    w2_ref, b2_ref,       # (HID, D), (1, D)
    ln2w_ref, ln2b_ref,   # (1, D)
    out_ref,              # (B*S, D)
):
    x = x_ref[...]                                                   # (BS, D)

    # ---- fused Q/K/V projection (single wide MXU matmul) ---------------------
    qkv = jnp.dot(x, wqkv_ref[...],
                  preferred_element_type=jnp.float32) + bqkv_ref[...]  # (BS, 3D)
    q = qkv[:, 0 * D:1 * D].reshape(B, S, D)   # already pre-scaled by 1/sqrt(HD)
    k = qkv[:, 1 * D:2 * D].reshape(B, S, D)
    v = qkv[:, 2 * D:3 * D].reshape(B, S, D)

    bias = bias_ref[...]                                             # (B, S, S)

    # ---- multi-head scaled dot-product attention -----------------------------
    # Output projection is distributed over heads:
    #   concat_h(head_h) @ Wo == sum_h head_h @ Wo[h*HD:(h+1)*HD, :]
    # so we accumulate directly into the residual slab (no scratch / concat).
    acc = x + bo_ref[...]                      # residual + output-proj bias (BS, D)
    for h in range(H):                         # static unroll over heads
        sl = slice(h * HD, (h + 1) * HD)
        qh, kh, vh = q[:, :, sl], k[:, :, sl], v[:, :, sl]           # (B, S, HD)

        # batched over B, contract last dims -> no explicit transpose of kh
        s = jnp.einsum('bqd,bkd->bqk', qh, kh,
                       preferred_element_type=jnp.float32)           # (B, S, S)
        # exact masked_fill(-1e32) semantics: min(score, +inf)=score,
        # min(score, -1e32)=-1e32 (also handles fully-masked rows -> uniform)
        s = jnp.minimum(s, bias)

        s = s - jnp.max(s, axis=-1, keepdims=True)
        e = jnp.exp(s)
        p = e * pl.reciprocal(jnp.sum(e, axis=-1, keepdims=True), approx=True)

        oh = jnp.einsum('bqk,bkd->bqd', p, vh,
                        preferred_element_type=jnp.float32)          # (B, S, HD)
        # head-slice of Wo has sublane-aligned rows (HD == 8)
        acc = acc + jnp.dot(oh.reshape(BS, HD), wo_ref[sl, :],
                            preferred_element_type=jnp.float32)      # (BS, D)

    # residual + layer norm (attention sublayer)
    y = _layer_norm(acc, ln1w_ref[...], ln1b_ref[...])               # (BS, D)

    # ---- feed-forward ---------------------------------------------------------
    h1 = jnp.dot(y, w1_ref[...], preferred_element_type=jnp.float32) + b1_ref[...]
    g = _gelu(h1)
    ff = jnp.dot(g, w2_ref[...], preferred_element_type=jnp.float32) + b2_ref[...]

    # residual + layer norm (feed-forward sublayer)
    out_ref[...] = _layer_norm(y + ff, ln2w_ref[...], ln2b_ref[...])


@jax.jit
def transformer_block(x, mask, params):
    """x: (B, S, D) f32, mask: (B, S, S) int32 (nonzero = mask out key)."""
    scale = jnp.float32(1.0 / math.sqrt(HD))
    # Fuse Q/K/V weights; fold the attention scale into the Q projection.
    wqkv = jnp.concatenate(
        [params["wq"] * scale, params["wk"], params["wv"]], axis=1)   # (D, 3D)
    bqkv = jnp.concatenate(
        [params["bq"] * scale, params["bk"], params["bv"]], axis=1)   # (1, 3D)
    # Precompute float mask: +inf keeps the score, -1e32 masks it (via minimum).
    bias = jnp.where(mask != 0, jnp.float32(-1e32),
                     jnp.float32(jnp.inf)).astype(jnp.float32)        # (B, S, S)

    x2d = x.reshape(BS, D)

    out2d = pl.pallas_call(
        transformer_block_kernel,
        out_shape=jax.ShapeDtypeStruct((BS, D), jnp.float32),
    )(
        x2d, bias,
        wqkv, bqkv,
        params["wo"], params["bo"],
        params["ln1w"], params["ln1b"],
        params["w1"], params["b1"], params["w2"], params["b2"],
        params["ln2w"], params["ln2b"],
    )
    return out2d.reshape(B, S, D)


# ---------------- pure-JAX reference (faithful to the PyTorch module) --------
def reference(x, mask, p):
    def ln(v, w, b):
        mu = jnp.mean(v, -1, keepdims=True)
        var = jnp.mean((v - mu) ** 2, -1, keepdims=True)
        return (v - mu) / jnp.sqrt(var + LN_EPS) * w[0] + b[0]

    q = x @ p["wq"] + p["bq"][0]
    k = x @ p["wk"] + p["bk"][0]
    v = x @ p["wv"] + p["bv"][0]

    def split(t):
        return t.reshape(B, S, H, HD).transpose(0, 2, 1, 3)

    qh, kh, vh = split(q), split(k), split(v)
    scores = jnp.einsum("bhid,bhjd->bhij", qh, kh) / math.sqrt(HD)
    mexp = (mask != 0)[:, None, :, :]
    scores = jnp.where(mexp, -1e32, scores)
    attn = jax.nn.softmax(scores, axis=-1)
    o = jnp.einsum("bhij,bhjd->bhid", attn, vh)
    o = o.transpose(0, 2, 1, 3).reshape(B, S, D)
    attn_out = o @ p["wo"] + p["bo"][0]
    y = ln(x + attn_out, p["ln1w"], p["ln1b"])
    h1 = y @ p["w1"] + p["b1"][0]
    g = 0.5 * h1 * (1.0 + jnp.tanh(0.7978845608 * (h1 + 0.044715 * h1 ** 3)))
    ff = g @ p["w2"] + p["b2"][0]
    return ln(y + ff, p["ln2w"], p["ln2b"])


if __name__ == "__main__":
    key = jax.random.PRNGKey(0)
    ks = jax.random.split(key, 16)

    def init_linear(kw, fan_in, fan_out):
        # deterministic, roughly PyTorch-like uniform init (weights stored (in, out))
        bound = 1.0 / math.sqrt(fan_in)
        w = jax.random.uniform(kw, (fan_in, fan_out), jnp.float32, -bound, bound)
        b = jax.random.uniform(jax.random.fold_in(kw, 1), (1, fan_out),
                               jnp.float32, -bound, bound)
        return w, b

    wq, bq = init_linear(ks[0], D, D)
    wk, bk = init_linear(ks[1], D, D)
    wv, bv = init_linear(ks[2], D, D)
    wo, bo = init_linear(ks[3], D, D)
    w1, b1 = init_linear(ks[4], D, HID)
    w2, b2 = init_linear(ks[5], HID, D)

    params = dict(
        wq=wq, bq=bq, wk=wk, bk=bk, wv=wv, bv=bv, wo=wo, bo=bo,
        ln1w=jnp.ones((1, D), jnp.float32), ln1b=jnp.zeros((1, D), jnp.float32),
        w1=w1, b1=b1, w2=w2, b2=b2,
        ln2w=jnp.ones((1, D), jnp.float32), ln2b=jnp.zeros((1, D), jnp.float32),
    )

    x = jax.random.normal(ks[6], (B, S, D), jnp.float32)
    # padding-style mask: for batch 1, mask out the last 2 key positions
    key_pad = np.zeros((B, S), np.int32)
    key_pad[1, -2:] = 1
    mask = jnp.asarray(np.broadcast_to(key_pad[:, None, :], (B, S, S)).copy(),
                       jnp.int32)

    out = transformer_block(x, mask, params)
    out = jax.block_until_ready(out)

    ref = jax.block_until_ready(reference(x, mask, params))
    assert out.shape == (B, S, D)
    assert np.allclose(np.asarray(out), np.asarray(ref), rtol=2e-2, atol=2e-2)

    print("KERNEL_OK")
</pallas_src>

<mosaic_0001>
module attributes {stable_mosaic.version = 11 : i64} {
  func.func @transformer_block_kernel(%arg0: memref<16x32xf32, #tpu.memory_space<vmem>>, %arg1: memref<2x8x8xf32, #tpu.memory_space<vmem>>, %arg2: memref<32x96xf32, #tpu.memory_space<vmem>>, %arg3: memref<1x96xf32, #tpu.memory_space<vmem>>, %arg4: memref<32x32xf32, #tpu.memory_space<vmem>>, %arg5: memref<1x32xf32, #tpu.memory_space<vmem>>, %arg6: memref<1x32xf32, #tpu.memory_space<vmem>>, %arg7: memref<1x32xf32, #tpu.memory_space<vmem>>, %arg8: memref<32x64xf32, #tpu.memory_space<vmem>>, %arg9: memref<1x64xf32, #tpu.memory_space<vmem>>, %arg10: memref<64x32xf32, #tpu.memory_space<vmem>>, %arg11: memref<1x32xf32, #tpu.memory_space<vmem>>, %arg12: memref<1x32xf32, #tpu.memory_space<vmem>>, %arg13: memref<1x32xf32, #tpu.memory_space<vmem>>, %arg14: memref<16x32xf32, #tpu.memory_space<vmem>>) attributes {dimension_semantics = [], scalar_prefetch = 0 : i64, scratch_operands = 0 : i64, tpu.core_type = #tpu.core_type<tc>} {
    %c0 = arith.constant 0 : index
    %c0_0 = arith.constant 0 : index
    %0 = vector.load %arg0[%c0, %c0_0] : memref<16x32xf32, #tpu.memory_space<vmem>>, vector<16x32xf32>
    %c0_1 = arith.constant 0 : index
    %c0_2 = arith.constant 0 : index
    %1 = vector.load %arg2[%c0_1, %c0_2] : memref<32x96xf32, #tpu.memory_space<vmem>>, vector<32x96xf32>
    %cst = arith.constant dense<0.000000e+00> : vector<16x96xf32>
    %2 = tpu.matmul %0, %1, %cst {dimension_numbers = #tpu.dot_dimension_numbers<[1], [0], [0], [1], [0, 0, 1, 1], [], []>} : vector<16x32xf32>, vector<32x96xf32>, vector<16x96xf32> -> vector<16x96xf32>
    %c0_3 = arith.constant 0 : index
    %c0_4 = arith.constant 0 : index
    %3 = vector.load %arg3[%c0_3, %c0_4] : memref<1x96xf32, #tpu.memory_space<vmem>>, vector<1x96xf32>
    %4 = vector.broadcast %3 : vector<1x96xf32> to vector<16x96xf32>
    %5 = arith.addf %2, %4 : vector<16x96xf32>
    %6 = vector.extract_strided_slice %5 {offsets = [0, 0], sizes = [16, 32], strides = [1, 1]} : vector<16x96xf32> to vector<16x32xf32>
    %7 = vector.shape_cast %6 : vector<16x32xf32> to vector<2x8x32xf32>
    %8 = vector.extract_strided_slice %5 {offsets = [0, 32], sizes = [16, 32], strides = [1, 1]} : vector<16x96xf32> to vector<16x32xf32>
    %9 = vector.shape_cast %8 : vector<16x32xf32> to vector<2x8x32xf32>
    %10 = vector.extract_strided_slice %5 {offsets = [0, 64], sizes = [16, 32], strides = [1, 1]} : vector<16x96xf32> to vector<16x32xf32>
    %11 = vector.shape_cast %10 : vector<16x32xf32> to vector<2x8x32xf32>
    %c0_5 = arith.constant 0 : index
    %c0_6 = arith.constant 0 : index
    %c0_7 = arith.constant 0 : index
    %12 = vector.load %arg1[%c0_5, %c0_6, %c0_7] : memref<2x8x8xf32, #tpu.memory_space<vmem>>, vector<2x8x8xf32>
    %c0_8 = arith.constant 0 : index
    %c0_9 = arith.constant 0 : index
    %13 = vector.load %arg5[%c0_8, %c0_9] : memref<1x32xf32, #tpu.memory_space<vmem>>, vector<1x32xf32>
    %14 = vector.broadcast %13 : vector<1x32xf32> to vector<16x32xf32>
    %15 = arith.addf %0, %14 : vector<16x32xf32>
    %16 = vector.extract_strided_slice %7 {offsets = [0, 0, 0], sizes = [2, 8, 8], strides = [1, 1, 1]} : vector<2x8x32xf32> to vector<2x8x8xf32>
    %17 = vector.extract_strided_slice %9 {offsets = [0, 0, 0], sizes = [2, 8, 8], strides = [1, 1, 1]} : vector<2x8x32xf32> to vector<2x8x8xf32>
    %18 = vector.extract_strided_slice %11 {offsets = [0, 0, 0], sizes = [2, 8, 8], strides = [1, 1, 1]} : vector<2x8x32xf32> to vector<2x8x8xf32>
    "tpu.trace_start"() <{level = 10 : i32, message = "bqd,bkd->bqk"}> : () -> ()
    %cst_10 = arith.constant dense<0.000000e+00> : vector<2x8x8xf32>
    %19 = tpu.matmul %16, %17, %cst_10 {dimension_numbers = #tpu.dot_dimension_numbers<[2], [2], [1], [1], [0, 0, 0, 1, 1, 1], [0], [0]>} : vector<2x8x8xf32>, vector<2x8x8xf32>, vector<2x8x8xf32> -> vector<2x8x8xf32>
    "tpu.trace_stop"() : () -> ()
    %20 = arith.minimumf %19, %12 : vector<2x8x8xf32>
    %cst_11 = arith.constant dense<0xFF800000> : vector<2x8xf32>
    %21 = vector.multi_reduction <maximumf>, %20, %cst_11 [2] : vector<2x8x8xf32> to vector<2x8xf32>
    %22 = vector.shape_cast %21 : vector<2x8xf32> to vector<2x8x1xf32>
    %23 = vector.broadcast %22 : vector<2x8x1xf32> to vector<2x8x8xf32>
    %24 = arith.subf %20, %23 : vector<2x8x8xf32>
    %25 = math.exp %24 : vector<2x8x8xf32>
    %cst_12 = arith.constant dense<0.000000e+00> : vector<2x8xf32>
    %26 = vector.multi_reduction <add>, %25, %cst_12 [2] : vector<2x8x8xf32> to vector<2x8xf32>
    %27 = vector.shape_cast %26 : vector<2x8xf32> to vector<2x8x1xf32>
    %28 = tpu.reciprocal %27 {approx = true} : vector<2x8x1xf32> -> vector<2x8x1xf32>
    %29 = vector.broadcast %28 : vector<2x8x1xf32> to vector<2x8x8xf32>
    %30 = arith.mulf %25, %29 : vector<2x8x8xf32>
    "tpu.trace_start"() <{level = 10 : i32, message = "bqk,bkd->bqd"}> : () -> ()
    %cst_13 = arith.constant dense<0.000000e+00> : vector<2x8x8xf32>
    %31 = tpu.matmul %30, %18, %cst_13 {dimension_numbers = #tpu.dot_dimension_numbers<[2], [1], [1], [2], [0, 0, 0, 1, 1, 2], [0], [0]>} : vector<2x8x8xf32>, vector<2x8x8xf32>, vector<2x8x8xf32> -> vector<2x8x8xf32>
    "tpu.trace_stop"() : () -> ()
    %32 = vector.shape_cast %31 : vector<2x8x8xf32> to vector<16x8xf32>
    %c0_14 = arith.constant 0 : index
    %c0_15 = arith.constant 0 : index
    %33 = vector.load %arg4[%c0_14, %c0_15] : memref<32x32xf32, #tpu.memory_space<vmem>>, vector<8x32xf32>
    %cst_16 = arith.constant dense<0.000000e+00> : vector<16x32xf32>
    %34 = tpu.matmul %32, %33, %cst_16 {dimension_numbers = #tpu.dot_dimension_numbers<[1], [0], [0], [1], [0, 0, 1, 1], [], []>} : vector<16x8xf32>, vector<8x32xf32>, vector<16x32xf32> -> vector<16x32xf32>
    %35 = arith.addf %15, %34 : vector<16x32xf32>
    %36 = vector.extract_strided_slice %7 {offsets = [0, 0, 8], sizes = [2, 8, 8], strides = [1, 1, 1]} : vector<2x8x32xf32> to vector<2x8x8xf32>
    %37 = vector.extract_strided_slice %9 {offsets = [0, 0, 8], sizes = [2, 8, 8], strides = [1, 1, 1]} : vector<2x8x32xf32> to vector<2x8x8xf32>
    %38 = vector.extract_strided_slice %11 {offsets = [0, 0, 8], sizes = [2, 8, 8], strides = [1, 1, 1]} : vector<2x8x32xf32> to vector<2x8x8xf32>
    "tpu.trace_start"() <{level = 10 : i32, message = "bqd,bkd->bqk"}> : () -> ()
    %cst_17 = arith.constant dense<0.000000e+00> : vector<2x8x8xf32>
    %39 = tpu.matmul %36, %37, %cst_17 {dimension_numbers = #tpu.dot_dimension_numbers<[2], [2], [1], [1], [0, 0, 0, 1, 1, 1], [0], [0]>} : vector<2x8x8xf32>, vector<2x8x8xf32>, vector<2x8x8xf32> -> vector<2x8x8xf32>
    "tpu.trace_stop"() : () -> ()
    %40 = arith.minimumf %39, %12 : vector<2x8x8xf32>
    %cst_18 = arith.constant dense<0xFF800000> : vector<2x8xf32>
    %41 = vector.multi_reduction <maximumf>, %40, %cst_18 [2] : vector<2x8x8xf32> to vector<2x8xf32>
    %42 = vector.shape_cast %41 : vector<2x8xf32> to vector<2x8x1xf32>
    %43 = vector.broadcast %42 : vector<2x8x1xf32> to vector<2x8x8xf32>
    %44 = arith.subf %40, %43 : vector<2x8x8xf32>
    %45 = math.exp %44 : vector<2x8x8xf32>
    %cst_19 = arith.constant dense<0.000000e+00> : vector<2x8xf32>
    %46 = vector.multi_reduction <add>, %45, %cst_19 [2] : vector<2x8x8xf32> to vector<2x8xf32>
    %47 = vector.shape_cast %46 : vector<2x8xf32> to vector<2x8x1xf32>
    %48 = tpu.reciprocal %47 {approx = true} : vector<2x8x1xf32> -> vector<2x8x1xf32>
    %49 = vector.broadcast %48 : vector<2x8x1xf32> to vector<2x8x8xf32>
    %50 = arith.mulf %45, %49 : vector<2x8x8xf32>
    "tpu.trace_start"() <{level = 10 : i32, message = "bqk,bkd->bqd"}> : () -> ()
    %cst_20 = arith.constant dense<0.000000e+00> : vector<2x8x8xf32>
    %51 = tpu.matmul %50, %38, %cst_20 {dimension_numbers = #tpu.dot_dimension_numbers<[2], [1], [1], [2], [0, 0, 0, 1, 1, 2], [0], [0]>} : vector<2x8x8xf32>, vector<2x8x8xf32>, vector<2x8x8xf32> -> vector<2x8x8xf32>
    "tpu.trace_stop"() : () -> ()
    %52 = vector.shape_cast %51 : vector<2x8x8xf32> to vector<16x8xf32>
    %c8 = arith.constant 8 : index
    %c0_21 = arith.constant 0 : index
    %53 = vector.load %arg4[%c8, %c0_21] : memref<32x32xf32, #tpu.memory_space<vmem>>, vector<8x32xf32>
    %cst_22 = arith.constant dense<0.000000e+00> : vector<16x32xf32>
    %54 = tpu.matmul %52, %53, %cst_22 {dimension_numbers = #tpu.dot_dimension_numbers<[1], [0], [0], [1], [0, 0, 1, 1], [], []>} : vector<16x8xf32>, vector<8x32xf32>, vector<16x32xf32> -> vector<16x32xf32>
    %55 = arith.addf %35, %54 : vector<16x32xf32>
    %56 = vector.extract_strided_slice %7 {offsets = [0, 0, 16], sizes = [2, 8, 8], strides = [1, 1, 1]} : vector<2x8x32xf32> to vector<2x8x8xf32>
    %57 = vector.extract_strided_slice %9 {offsets = [0, 0, 16], sizes = [2, 8, 8], strides = [1, 1, 1]} : vector<2x8x32xf32> to vector<2x8x8xf32>
    %58 = vector.extract_strided_slice %11 {offsets = [0, 0, 16], sizes = [2, 8, 8], strides = [1, 1, 1]} : vector<2x8x32xf32> to vector<2x8x8xf32>
    "tpu.trace_start"() <{level = 10 : i32, message = "bqd,bkd->bqk"}> : () -> ()
    %cst_23 = arith.constant dense<0.000000e+00> : vector<2x8x8xf32>
    %59 = tpu.matmul %56, %57, %cst_23 {dimension_numbers = #tpu.dot_dimension_numbers<[2], [2], [1], [1], [0, 0, 0, 1, 1, 1], [0], [0]>} : vector<2x8x8xf32>, vector<2x8x8xf32>, vector<2x8x8xf32> -> vector<2x8x8xf32>
    "tpu.trace_stop"() : () -> ()
    %60 = arith.minimumf %59, %12 : vector<2x8x8xf32>
    %cst_24 = arith.constant dense<0xFF800000> : vector<2x8xf32>
    %61 = vector.multi_reduction <maximumf>, %60, %cst_24 [2] : vector<2x8x8xf32> to vector<2x8xf32>
    %62 = vector.shape_cast %61 : vector<2x8xf32> to vector<2x8x1xf32>
    %63 = vector.broadcast %62 : vector<2x8x1xf32> to vector<2x8x8xf32>
    %64 = arith.subf %60, %63 : vector<2x8x8xf32>
    %65 = math.exp %64 : vector<2x8x8xf32>
    %cst_25 = arith.constant dense<0.000000e+00> : vector<2x8xf32>
    %66 = vector.multi_reduction <add>, %65, %cst_25 [2] : vector<2x8x8xf32> to vector<2x8xf32>
    %67 = vector.shape_cast %66 : vector<2x8xf32> to vector<2x8x1xf32>
    %68 = tpu.reciprocal %67 {approx = true} : vector<2x8x1xf32> -> vector<2x8x1xf32>
    %69 = vector.broadcast %68 : vector<2x8x1xf32> to vector<2x8x8xf32>
    %70 = arith.mulf %65, %69 : vector<2x8x8xf32>
    "tpu.trace_start"() <{level = 10 : i32, message = "bqk,bkd->bqd"}> : () -> ()
    %cst_26 = arith.constant dense<0.000000e+00> : vector<2x8x8xf32>
    %71 = tpu.matmul %70, %58, %cst_26 {dimension_numbers = #tpu.dot_dimension_numbers<[2], [1], [1], [2], [0, 0, 0, 1, 1, 2], [0], [0]>} : vector<2x8x8xf32>, vector<2x8x8xf32>, vector<2x8x8xf32> -> vector<2x8x8xf32>
    "tpu.trace_stop"() : () -> ()
    %72 = vector.shape_cast %71 : vector<2x8x8xf32> to vector<16x8xf32>
    %c16 = arith.constant 16 : index
    %c0_27 = arith.constant 0 : index
    %73 = vector.load %arg4[%c16, %c0_27] : memref<32x32xf32, #tpu.memory_space<vmem>>, vector<8x32xf32>
    %cst_28 = arith.constant dense<0.000000e+00> : vector<16x32xf32>
    %74 = tpu.matmul %72, %73, %cst_28 {dimension_numbers = #tpu.dot_dimension_numbers<[1], [0], [0], [1], [0, 0, 1, 1], [], []>} : vector<16x8xf32>, vector<8x32xf32>, vector<16x32xf32> -> vector<16x32xf32>
    %75 = arith.addf %55, %74 : vector<16x32xf32>
    %76 = vector.extract_strided_slice %7 {offsets = [0, 0, 24], sizes = [2, 8, 8], strides = [1, 1, 1]} : vector<2x8x32xf32> to vector<2x8x8xf32>
    %77 = vector.extract_strided_slice %9 {offsets = [0, 0, 24], sizes = [2, 8, 8], strides = [1, 1, 1]} : vector<2x8x32xf32> to vector<2x8x8xf32>
    %78 = vector.extract_strided_slice %11 {offsets = [0, 0, 24], sizes = [2, 8, 8], strides = [1, 1, 1]} : vector<2x8x32xf32> to vector<2x8x8xf32>
    "tpu.trace_start"() <{level = 10 : i32, message = "bqd,bkd->bqk"}> : () -> ()
    %cst_29 = arith.constant dense<0.000000e+00> : vector<2x8x8xf32>
    %79 = tpu.matmul %76, %77, %cst_29 {dimension_numbers = #tpu.dot_dimension_numbers<[2], [2], [1], [1], [0, 0, 0, 1, 1, 1], [0], [0]>} : vector<2x8x8xf32>, vector<2x8x8xf32>, vector<2x8x8xf32> -> vector<2x8x8xf32>
    "tpu.trace_stop"() : () -> ()
    %80 = arith.minimumf %79, %12 : vector<2x8x8xf32>
    %cst_30 = arith.constant dense<0xFF800000> : vector<2x8xf32>
    %81 = vector.multi_reduction <maximumf>, %80, %cst_30 [2] : vector<2x8x8xf32> to vector<2x8xf32>
    %82 = vector.shape_cast %81 : vector<2x8xf32> to vector<2x8x1xf32>
    %83 = vector.broadcast %82 : vector<2x8x1xf32> to vector<2x8x8xf32>
    %84 = arith.subf %80, %83 : vector<2x8x8xf32>
    %85 = math.exp %84 : vector<2x8x8xf32>
    %cst_31 = arith.constant dense<0.000000e+00> : vector<2x8xf32>
    %86 = vector.multi_reduction <add>, %85, %cst_31 [2] : vector<2x8x8xf32> to vector<2x8xf32>
    %87 = vector.shape_cast %86 : vector<2x8xf32> to vector<2x8x1xf32>
    %88 = tpu.reciprocal %87 {approx = true} : vector<2x8x1xf32> -> vector<2x8x1xf32>
    %89 = vector.broadcast %88 : vector<2x8x1xf32> to vector<2x8x8xf32>
    %90 = arith.mulf %85, %89 : vector<2x8x8xf32>
    "tpu.trace_start"() <{level = 10 : i32, message = "bqk,bkd->bqd"}> : () -> ()
    %cst_32 = arith.constant dense<0.000000e+00> : vector<2x8x8xf32>
    %91 = tpu.matmul %90, %78, %cst_32 {dimension_numbers = #tpu.dot_dimension_numbers<[2], [1], [1], [2], [0, 0, 0, 1, 1, 2], [0], [0]>} : vector<2x8x8xf32>, vector<2x8x8xf32>, vector<2x8x8xf32> -> vector<2x8x8xf32>
    "tpu.trace_stop"() : () -> ()
    %92 = vector.shape_cast %91 : vector<2x8x8xf32> to vector<16x8xf32>
    %c24 = arith.constant 24 : index
    %c0_33 = arith.constant 0 : index
    %93 = vector.load %arg4[%c24, %c0_33] : memref<32x32xf32, #tpu.memory_space<vmem>>, vector<8x32xf32>
    %cst_34 = arith.constant dense<0.000000e+00> : vector<16x32xf32>
    %94 = tpu.matmul %92, %93, %cst_34 {dimension_numbers = #tpu.dot_dimension_numbers<[1], [0], [0], [1], [0, 0, 1, 1], [], []>} : vector<16x8xf32>, vector<8x32xf32>, vector<16x32xf32> -> vector<16x32xf32>
    %95 = arith.addf %75, %94 : vector<16x32xf32>
    %c0_35 = arith.constant 0 : index
    %c0_36 = arith.constant 0 : index
    %96 = vector.load %arg6[%c0_35, %c0_36] : memref<1x32xf32, #tpu.memory_space<vmem>>, vector<1x32xf32>
    %c0_37 = arith.constant 0 : index
    %c0_38 = arith.constant 0 : index
    %97 = vector.load %arg7[%c0_37, %c0_38] : memref<1x32xf32, #tpu.memory_space<vmem>>, vector<1x32xf32>
    %cst_39 = arith.constant dense<0.000000e+00> : vector<16xf32>
    %98 = vector.multi_reduction <add>, %95, %cst_39 [1] : vector<16x32xf32> to vector<16xf32>
    %99 = vector.shape_cast %98 : vector<16xf32> to vector<16x1xf32>
    %cst_40 = arith.constant 3.200000e+01 : f32
    %100 = vector.broadcast %cst_40 : f32 to vector<16x1xf32>
    %101 = arith.divf %99, %100 : vector<16x1xf32>
    %102 = vector.broadcast %101 : vector<16x1xf32> to vector<16x32xf32>
    %103 = arith.subf %95, %102 : vector<16x32xf32>
    %104 = arith.mulf %103, %103 : vector<16x32xf32>
    %cst_41 = arith.constant dense<0.000000e+00> : vector<16xf32>
    %105 = vector.multi_reduction <add>, %104, %cst_41 [1] : vector<16x32xf32> to vector<16xf32>
    %106 = vector.shape_cast %105 : vector<16xf32> to vector<16x1xf32>
    %cst_42 = arith.constant 3.200000e+01 : f32
    %107 = vector.broadcast %cst_42 : f32 to vector<16x1xf32>
    %108 = arith.divf %106, %107 : vector<16x1xf32>
    %109 = vector.broadcast %101 : vector<16x1xf32> to vector<16x32xf32>
    %110 = arith.subf %95, %109 : vector<16x32xf32>
    %cst_43 = arith.constant 9.99999974E-6 : f32
    %111 = vector.broadcast %cst_43 : f32 to vector<16x1xf32>
    %112 = arith.addf %108, %111 : vector<16x1xf32>
    %113 = math.rsqrt %112 : vector<16x1xf32>
    %114 = vector.broadcast %113 : vector<16x1xf32> to vector<16x32xf32>
    %115 = arith.mulf %110, %114 : vector<16x32xf32>
    %116 = vector.broadcast %96 : vector<1x32xf32> to vector<16x32xf32>
    %117 = arith.mulf %115, %116 : vector<16x32xf32>
    %118 = vector.broadcast %97 : vector<1x32xf32> to vector<16x32xf32>
    %119 = arith.addf %117, %118 : vector<16x32xf32>
    %c0_44 = arith.constant 0 : index
    %c0_45 = arith.constant 0 : index
    %120 = vector.load %arg8[%c0_44, %c0_45] : memref<32x64xf32, #tpu.memory_space<vmem>>, vector<32x64xf32>
    %cst_46 = arith.constant dense<0.000000e+00> : vector<16x64xf32>
    %121 = tpu.matmul %119, %120, %cst_46 {dimension_numbers = #tpu.dot_dimension_numbers<[1], [0], [0], [1], [0, 0, 1, 1], [], []>} : vector<16x32xf32>, vector<32x64xf32>, vector<16x64xf32> -> vector<16x64xf32>
    %c0_47 = arith.constant 0 : index
    %c0_48 = arith.constant 0 : index
    %122 = vector.load %arg9[%c0_47, %c0_48] : memref<1x64xf32, #tpu.memory_space<vmem>>, vector<1x64xf32>
    %123 = vector.broadcast %122 : vector<1x64xf32> to vector<16x64xf32>
    %124 = arith.addf %121, %123 : vector<16x64xf32>
    %cst_49 = arith.constant 5.000000e-01 : f32
    %125 = vector.broadcast %cst_49 : f32 to vector<16x64xf32>
    %126 = arith.mulf %125, %124 : vector<16x64xf32>
    %cst_50 = arith.constant 4.471500e-02 : f32
    %127 = vector.broadcast %cst_50 : f32 to vector<16x64xf32>
    %128 = arith.mulf %127, %124 : vector<16x64xf32>
    %129 = arith.mulf %128, %124 : vector<16x64xf32>
    %130 = arith.mulf %129, %124 : vector<16x64xf32>
    %131 = arith.addf %124, %130 : vector<16x64xf32>
    %cst_51 = arith.constant 0.797884583 : f32
    %132 = vector.broadcast %cst_51 : f32 to vector<16x64xf32>
    %133 = arith.mulf %132, %131 : vector<16x64xf32>
    %134 = math.tanh %133 : vector<16x64xf32>
    %cst_52 = arith.constant 1.000000e+00 : f32
    %135 = vector.broadcast %cst_52 : f32 to vector<16x64xf32>
    %136 = arith.addf %135, %134 : vector<16x64xf32>
    %137 = arith.mulf %126, %136 : vector<16x64xf32>
    %c0_53 = arith.constant 0 : index
    %c0_54 = arith.constant 0 : index
    %138 = vector.load %arg10[%c0_53, %c0_54] : memref<64x32xf32, #tpu.memory_space<vmem>>, vector<64x32xf32>
    %cst_55 = arith.constant dense<0.000000e+00> : vector<16x32xf32>
    %139 = tpu.matmul %137, %138, %cst_55 {dimension_numbers = #tpu.dot_dimension_numbers<[1], [0], [0], [1], [0, 0, 1, 1], [], []>} : vector<16x64xf32>, vector<64x32xf32>, vector<16x32xf32> -> vector<16x32xf32>
    %c0_56 = arith.constant 0 : index
    %c0_57 = arith.constant 0 : index
    %140 = vector.load %arg11[%c0_56, %c0_57] : memref<1x32xf32, #tpu.memory_space<vmem>>, vector<1x32xf32>
    %141 = vector.broadcast %140 : vector<1x32xf32> to vector<16x32xf32>
    %142 = arith.addf %139, %141 : vector<16x32xf32>
    %143 = arith.addf %119, %142 : vector<16x32xf32>
    %c0_58 = arith.constant 0 : index
    %c0_59 = arith.constant 0 : index
    %144 = vector.load %arg12[%c0_58, %c0_59] : memref<1x32xf32, #tpu.memory_space<vmem>>, vector<1x32xf32>
    %c0_60 = arith.constant 0 : index
    %c0_61 = arith.constant 0 : index
    %145 = vector.load %arg13[%c0_60, %c0_61] : memref<1x32xf32, #tpu.memory_space<vmem>>, vector<1x32xf32>
    %cst_62 = arith.constant dense<0.000000e+00> : vector<16xf32>
    %146 = vector.multi_reduction <add>, %143, %cst_62 [1] : vector<16x32xf32> to vector<16xf32>
    %147 = vector.shape_cast %146 : vector<16xf32> to vector<16x1xf32>
    %cst_63 = arith.constant 3.200000e+01 : f32
    %148 = vector.broadcast %cst_63 : f32 to vector<16x1xf32>
    %149 = arith.divf %147, %148 : vector<16x1xf32>
    %150 = vector.broadcast %149 : vector<16x1xf32> to vector<16x32xf32>
    %151 = arith.subf %143, %150 : vector<16x32xf32>
    %152 = arith.mulf %151, %151 : vector<16x32xf32>
    %cst_64 = arith.constant dense<0.000000e+00> : vector<16xf32>
    %153 = vector.multi_reduction <add>, %152, %cst_64 [1] : vector<16x32xf32> to vector<16xf32>
    %154 = vector.shape_cast %153 : vector<16xf32> to vector<16x1xf32>
    %cst_65 = arith.constant 3.200000e+01 : f32
    %155 = vector.broadcast %cst_65 : f32 to vector<16x1xf32>
    %156 = arith.divf %154, %155 : vector<16x1xf32>
    %157 = vector.broadcast %149 : vector<16x1xf32> to vector<16x32xf32>
    %158 = arith.subf %143, %157 : vector<16x32xf32>
    %cst_66 = arith.constant 9.99999974E-6 : f32
    %159 = vector.broadcast %cst_66 : f32 to vector<16x1xf32>
    %160 = arith.addf %156, %159 : vector<16x1xf32>
    %161 = math.rsqrt %160 : vector<16x1xf32>
    %162 = vector.broadcast %161 : vector<16x1xf32> to vector<16x32xf32>
    %163 = arith.mulf %158, %162 : vector<16x32xf32>
    %164 = vector.broadcast %144 : vector<1x32xf32> to vector<16x32xf32>
    %165 = arith.mulf %163, %164 : vector<16x32xf32>
    %166 = vector.broadcast %145 : vector<1x32xf32> to vector<16x32xf32>
    %167 = arith.addf %165, %166 : vector<16x32xf32>
    %c0_67 = arith.constant 0 : index
    %c0_68 = arith.constant 0 : index
    %168 = vector.load %arg14[%c0_67, %c0_68] : memref<16x32xf32, #tpu.memory_space<vmem>>, vector<16x32xf32>
    tpu.vector_store %arg14[%c0_67, %c0_68], %167 {strides = array<i32>} : memref<16x32xf32, #tpu.memory_space<vmem>>, vector<16x32xf32>,
    return
  }
}

</mosaic_0001>

<llo_original>
// kernel: transformer_block.1
$region0: #{transformer_block.1}
  #allocation0 [shape = 'u32[]', space=smem, size = 0x4, offset = 0x4, fixed_abs, tag = 'smem constant byte address 0x4 - core index']
  #allocation1 [shape = 'u32[144,128]{1,0:T(1,128)}', space=vmem, size = 0x12000, scoped, tag = 'internal scratch']
  %s0 = inlined_call_operand.vmem [shape: f32[16,32], index: 0, kind: input, shape index: {}]
  %s1 = inlined_call_operand.vmem [shape: f32[2,8,8], index: 1, kind: input, shape index: {}]
  %s2 = inlined_call_operand.vmem [shape: f32[32,96], index: 2, kind: input, shape index: {}]
  %s3 = inlined_call_operand.vmem [shape: f32[1,96], index: 3, kind: input, shape index: {}]
  %s4 = inlined_call_operand.vmem [shape: f32[32,32], index: 4, kind: input, shape index: {}]
  %s5 = inlined_call_operand.vmem [shape: f32[1,32], index: 5, kind: input, shape index: {}]
  %s6 = inlined_call_operand.vmem [shape: f32[1,32], index: 6, kind: input, shape index: {}]
  %s7 = inlined_call_operand.vmem [shape: f32[1,32], index: 7, kind: input, shape index: {}]
  %s8 = inlined_call_operand.vmem [shape: f32[32,64], index: 8, kind: input, shape index: {}]
  %s9 = inlined_call_operand.vmem [shape: f32[1,64], index: 9, kind: input, shape index: {}]
  %s10 = inlined_call_operand.vmem [shape: f32[64,32], index: 10, kind: input, shape index: {}]
  %s11 = inlined_call_operand.vmem [shape: f32[1,32], index: 11, kind: input, shape index: {}]
  %s12 = inlined_call_operand.vmem [shape: f32[1,32], index: 12, kind: input, shape index: {}]
  %s13 = inlined_call_operand.vmem [shape: f32[1,32], index: 13, kind: input, shape index: {}]
  %s14 = inlined_call_operand.hbm [shape: f32[16,32], index: 14, kind: output, shape index: {}]
  %s15 = sld [smem:[#allocation0]]
  $region66: #{transformer_block.1} parent=0
    _
  %s17 = ssub.s32 1, %s15
  %s18 = scalar_select 0, %s17, %s15
  $region1: #{transformer_block.1} parent=0
    #allocation2 [shape = 'u8[8192]{0}', space=vmem, size = 0x2000, scoped, tag = 'output window, operand 0, single buffered']
    #allocation3 [shape = 's32[1]{0}', space=sflag, size = 0x4, scoped, tag = 'scoped memory for transformer_block.1']
    %19 = vsyncpa [#allocation3], 0
    // Predicated region
    $region2: #{transformer_block.1} parent=1 // pred_check
      _
    $region3: #{transformer_block.1} parent=1 // pred_check_branch
      %21 = sbr.rel (0) target = $region5
    $region4: #{transformer_block.1} parent=1 // pred_region
      _
    $region5: #{transformer_block.1} parent=1 // pred_fallthru
      _
    // Predicated region
    $region6: #{transformer_block.1} parent=1 // pred_check
      _
    $region7: #{transformer_block.1} parent=1 // pred_check_branch
      %23 = sbr.rel (0) target = $region9
    $region8: #{transformer_block.1} parent=1 // pred_region
      _
    $region9: #{transformer_block.1} parent=1 // pred_fallthru
      _
    // Predicated region
    $region10: #{transformer_block.1} parent=1 // pred_check
      _
    $region11: #{transformer_block.1} parent=1 // pred_check_branch
      %25 = sbr.rel (0) target = $region13
    $region12: #{transformer_block.1} parent=1 // pred_region
      _
    $region13: #{transformer_block.1} parent=1 // pred_fallthru
      _
    // Predicated region
    $region14: #{transformer_block.1} parent=1 // pred_check
      _
    $region15: #{transformer_block.1} parent=1 // pred_check_branch
      %27 = sbr.rel (0) target = $region17
    $region16: #{transformer_block.1} parent=1 // pred_region
      _
    $region17: #{transformer_block.1} parent=1 // pred_fallthru
      _
    // Predicated region
    $region18: #{transformer_block.1} parent=1 // pred_check
      _
    $region19: #{transformer_block.1} parent=1 // pred_check_branch
      %29 = sbr.rel (0) target = $region21
    $region20: #{transformer_block.1} parent=1 // pred_region
      _
    $region21: #{transformer_block.1} parent=1 // pred_fallthru
      _
    // Predicated region
    $region22: #{transformer_block.1} parent=1 // pred_check
      _
    $region23: #{transformer_block.1} parent=1 // pred_check_branch
      %31 = sbr.rel (0) target = $region25
    $region24: #{transformer_block.1} parent=1 // pred_region
      _
    $region25: #{transformer_block.1} parent=1 // pred_fallthru
      _
    // Predicated region
    $region26: #{transformer_block.1} parent=1 // pred_check
      _
    $region27: #{transformer_block.1} parent=1 // pred_check_branch
      %33 = sbr.rel (0) target = $region29
    $region28: #{transformer_block.1} parent=1 // pred_region
      _
    $region29: #{transformer_block.1} parent=1 // pred_fallthru
      _
    // Predicated region
    $region30: #{transformer_block.1} parent=1 // pred_check
      _
    $region31: #{transformer_block.1} parent=1 // pred_check_branch
      %35 = sbr.rel (0) target = $region33
    $region32: #{transformer_block.1} parent=1 // pred_region
      _
    $region33: #{transformer_block.1} parent=1 // pred_fallthru
      _
    // Predicated region
    $region34: #{transformer_block.1} parent=1 // pred_check
      _
    $region35: #{transformer_block.1} parent=1 // pred_check_branch
      %37 = sbr.rel (0) target = $region37
    $region36: #{transformer_block.1} parent=1 // pred_region
      _
    $region37: #{transformer_block.1} parent=1 // pred_fallthru
      _
    // Predicated region
    $region38: #{transformer_block.1} parent=1 // pred_check
      _
    $region39: #{transformer_block.1} parent=1 // pred_check_branch
      %39 = sbr.rel (0) target = $region41
    $region40: #{transformer_block.1} parent=1 // pred_region
      _
    $region41: #{transformer_block.1} parent=1 // pred_fallthru
      _
    // Predicated region
    $region42: #{transformer_block.1} parent=1 // pred_check
      _
    $region43: #{transformer_block.1} parent=1 // pred_check_branch
      %41 = sbr.rel (0) target = $region45
    $region44: #{transformer_block.1} parent=1 // pred_region
      _
    $region45: #{transformer_block.1} parent=1 // pred_fallthru
      _
    // Predicated region
    $region46: #{transformer_block.1} parent=1 // pred_check
      _
    $region47: #{transformer_block.1} parent=1 // pred_check_branch
      %43 = sbr.rel (0) target = $region49
    $region48: #{transformer_block.1} parent=1 // pred_region
      _
    $region49: #{transformer_block.1} parent=1 // pred_fallthru
      _
    // Predicated region
    $region50: #{transformer_block.1} parent=1 // pred_check
      _
    $region51: #{transformer_block.1} parent=1 // pred_check_branch
      %45 = sbr.rel (0) target = $region53
    $region52: #{transformer_block.1} parent=1 // pred_region
      _
    $region53: #{transformer_block.1} parent=1 // pred_fallthru
      _
    // Predicated region
    $region54: #{transformer_block.1} parent=1 // pred_check
      _
    $region55: #{transformer_block.1} parent=1 // pred_check_branch
      %47 = sbr.rel (0) target = $region57
    $region56: #{transformer_block.1} parent=1 // pred_region
      _
    $region57: #{transformer_block.1} parent=1 // pred_fallthru
      _
    %v48 = vld [vmem:[%s0] sm:$0xff]
    %v49 = vld [vmem:[%s0 + $0x8] sm:$0xff]
    %v50 = vld [vmem:[%s2] sm:$0xff]
    %v51 = vld [vmem:[%s2 + $0x8] sm:$0xff]
    %v52 = vld [vmem:[%s2 + $0x10] sm:$0xff]
    %v53 = vld [vmem:[%s2 + $0x18] sm:$0xff]
    %v54 = vld [vmem:[%s3] sm:$0x1]
    %v56 = vlaneseq
    %v57 = vshrl.u32 %v56, 7
    %v58 = vsub.s32 0, %v57
    %v59 = vrot.slane %v54, %v58
    %vm61 = vcmask 261120
    %v63 = vsel %vm61, %v48, 0
    %v66 = vsel %vm61, %v49, 0
    %68 = vmatprep.subr.mxu0 0.0
    %69 = vmatpush1.msra.mxu0 0.0
    %70 = vmatprep.subr.mxu0 0.0
    %71 = vmatpush1.msra.mxu0 0.0
    %72 = vmatprep.subr.mxu0 0.0
    %73 = vmatpush1.msra.mxu0 0.0
    %74 = vmatprep.subr.mxu0 0.0
    %75 = vmatpush1.msra.mxu0 0.0
    %76 = vmatprep.subr.mxu0 0.0
    %77 = vmatpush1.msra.mxu0 0.0
    %78 = vmatprep.subr.mxu0 0.0
    %79 = vmatpush1.msra.mxu0 0.0
    %80 = vmatprep.subr.mxu0 0.0
    %81 = vmatpush1.msra.mxu0 0.0
    %82 = vmatprep.subr.mxu0 0.0
    %83 = vmatpush1.msra.mxu0 0.0
    %84 = vmatprep.subr.mxu0 0.0
    %85 = vmatpush1.msra.mxu0 0.0
    %86 = vmatprep.subr.mxu0 0.0
    %87 = vmatpush1.msra.mxu0 0.0
    %88 = vmatprep.subr.mxu0 0.0
    %89 = vmatpush1.msra.mxu0 0.0
    %90 = vmatprep.subr.mxu0 0.0
    %91 = vmatpush1.msra.mxu0 0.0
    %92 = vmatprep.subr.mxu0 0.0
    %93 = vmatpush1.msra.mxu0 %v53
    %94 = vmatprep.subr.mxu0 0.0
    %95 = vmatpush1.msra.mxu0 %v52
    %96 = vmatprep.subr.mxu0 0.0
    %97 = vmatpush1.msra.mxu0 %v51
    %98 = vmatprep.subr.mxu0 0.0
    %99 = vmatpush1.msra.mxu0 %v50
    %100 = vmatprep.subr.mxu0 0.0
    %101 = vmatpush2.msra.mxu0 0.0
    %102 = vmatprep.subr.mxu0 0.0
    %103 = vmatpush2.msra.mxu0 0.0
    %104 = vmatprep.subr.mxu0 0.0
    %105 = vmatpush2.msra.mxu0 0.0
    %106 = vmatprep.subr.mxu0 0.0
    %107 = vmatpush2.msra.mxu0 0.0
    %108 = vmatprep.subr.mxu0 0.0
    %109 = vmatpush2.msra.mxu0 0.0
    %110 = vmatprep.subr.mxu0 0.0
    %111 = vmatpush2.msra.mxu0 0.0
    %112 = vmatprep.subr.mxu0 0.0
    %113 = vmatpush2.msra.mxu0 0.0
    %114 = vmatprep.subr.mxu0 0.0
    %115 = vmatpush2.msra.mxu0 0.0
    %116 = vmatprep.subr.mxu0 0.0
    %117 = vmatpush2.msra.mxu0 0.0
    %118 = vmatprep.subr.mxu0 0.0
    %119 = vmatpush2.msra.mxu0 0.0
    %120 = vmatprep.subr.mxu0 0.0
    %121 = vmatpush2.msra.mxu0 0.0
    %122 = vmatprep.subr.mxu0 0.0
    %123 = vmatpush2.msra.mxu0 0.0
    %124 = vmatprep.subr.mxu0 0.0
    %125 = vmatpush2.msra.mxu0 0.0
    %126 = vmatprep.subr.mxu0 0.0
    %127 = vmatpush2.msra.mxu0 0.0
    %128 = vmatprep.subr.mxu0 0.0
    %129 = vmatpush2.msra.mxu0 0.0
    %130 = vmatprep.subr.mxu0 0.0
    %131 = vmatpush2.msra.mxu0 0.0
    %132 = vmatprep.mubr.f32.mxu0 0.0
    %133 = vmatmul.mubr.f32.gmra.mxu0 %v63
    %v134 = vpop.f32.mrf.mxu0
    %v135 = vadd.f32 %v59, %v134
    %v136 = vpop.f32.mrf.mxu0
    %137 = vmatprep.mubr.f32.mxu0 0.0
    %138 = vmatmul.mubr.f32.gmra.mxu0 %v66
    %v139 = vpop.f32.mrf.mxu0
    %v140 = vadd.f32 %v59, %v139
    %v141 = vpop.f32.mrf.mxu0
    %142 = vdwg.mxu0
    %v143 = vld [vmem:[%s1] sm:$0xff]
    %v144 = vld [vmem:[%s1 + $0x8] sm:$0xff]
    %v145 = vld [vmem:[%s5] sm:$0x1]
    %v147 = vlaneseq
    %v148 = vshrl.u32 %v147, 7
    %v149 = vsub.s32 0, %v148
    %v150 = vrot.slane %v145, %v149
    %v152 = vadd.f32 %v48, %v150
    %v153 = vadd.f32 %v49, %v150
    %155 = vrot.lane.b32.xlu0 %v135, 96
    %v156 = vpop.permute.xlu0 %155
    %vm157 = vcmask 64512
    %v158 = vsel %vm157, %v135, 0
    %v160 = vsel %vm157, %v156, 0
    %162 = vmatprep.subr.mxu0 0.0
    %163 = vmatpush1.xpose.msra.mxu0 0.0
    %164 = vmatprep.subr.mxu0 0.0
    %165 = vmatpush1.xpose.msra.mxu0 0.0
    %166 = vmatprep.subr.mxu0 0.0
    %167 = vmatpush1.xpose.msra.mxu0 0.0
    %168 = vmatprep.subr.mxu0 0.0
    %169 = vmatpush1.xpose.msra.mxu0 0.0
    %170 = vmatprep.subr.mxu0 0.0
    %171 = vmatpush1.xpose.msra.mxu0 0.0
    %172 = vmatprep.subr.mxu0 0.0
    %173 = vmatpush1.xpose.msra.mxu0 0.0
    %174 = vmatprep.subr.mxu0 0.0
    %175 = vmatpush1.xpose.msra.mxu0 0.0
    %176 = vmatprep.subr.mxu0 0.0
    %177 = vmatpush1.xpose.msra.mxu0 0.0
    %178 = vmatprep.subr.mxu0 0.0
    %179 = vmatpush1.xpose.msra.mxu0 0.0
    %180 = vmatprep.subr.mxu0 0.0
    %181 = vmatpush1.xpose.msra.mxu0 0.0
    %182 = vmatprep.subr.mxu0 0.0
    %183 = vmatpush1.xpose.msra.mxu0 0.0
    %184 = vmatprep.subr.mxu0 0.0
    %185 = vmatpush1.xpose.msra.mxu0 0.0
    %186 = vmatprep.subr.mxu0 0.0
    %187 = vmatpush1.xpose.msra.mxu0 0.0
    %188 = vmatprep.subr.mxu0 0.0
    %189 = vmatpush1.xpose.msra.mxu0 0.0
    %190 = vmatprep.subr.mxu0 0.0
    %191 = vmatpush1.xpose.msra.mxu0 0.0
    %192 = vmatprep.subr.mxu0 0.0
    %193 = vmatpush1.xpose.msra.mxu0 %v160
    %194 = vmatprep.subr.mxu0 0.0
    %195 = vmatpush2.xpose.msra.mxu0 0.0
    %196 = vmatprep.subr.mxu0 0.0
    %197 = vmatpush2.xpose.msra.mxu0 0.0
    %198 = vmatprep.subr.mxu0 0.0
    %199 = vmatpush2.xpose.msra.mxu0 0.0
    %200 = vmatprep.subr.mxu0 0.0
    %201 = vmatpush2.xpose.msra.mxu0 0.0
    %202 = vmatprep.subr.mxu0 0.0
    %203 = vmatpush2.xpose.msra.mxu0 0.0
    %204 = vmatprep.subr.mxu0 0.0
    %205 = vmatpush2.xpose.msra.mxu0 0.0
    %206 = vmatprep.subr.mxu0 0.0
    %207 = vmatpush2.xpose.msra.mxu0 0.0
    %208 = vmatprep.subr.mxu0 0.0
    %209 = vmatpush2.xpose.msra.mxu0 0.0
    %210 = vmatprep.subr.mxu0 0.0
    %211 = vmatpush2.xpose.msra.mxu0 0.0
    %212 = vmatprep.subr.mxu0 0.0
    %213 = vmatpush2.xpose.msra.mxu0 0.0
    %214 = vmatprep.subr.mxu0 0.0
    %215 = vmatpush2.xpose.msra.mxu0 0.0
    %216 = vmatprep.subr.mxu0 0.0
    %217 = vmatpush2.xpose.msra.mxu0 0.0
    %218 = vmatprep.subr.mxu0 0.0
    %219 = vmatpush2.xpose.msra.mxu0 0.0
    %220 = vmatprep.subr.mxu0 0.0
    %221 = vmatpush2.xpose.msra.mxu0 0.0
    %222 = vmatprep.subr.mxu0 0.0
    %223 = vmatpush2.xpose.msra.mxu0 0.0
    %224 = vmatprep.subr.mxu0 0.0
    %225 = vmatpush2.xpose.msra.mxu0 0.0
    %226 = vmatprep.mubr.f32.mxu0 0.0
    %227 = vmatmul.mubr.f32.gmra.mxu0 %v158
    %v228 = vpop.f32.mrf.mxu0
    %v229 = vadd.f32 0.0, %v228
    %v230 = vpop.f32.mrf.mxu0
    %231 = vdwg.mxu0
    %233 = vrot.lane.b32.xlu0 %v140, 96
    %v234 = vpop.permute.xlu0 %233
    %v235 = vsel %vm157, %v140, 0
    %v237 = vsel %vm157, %v234, 0
    %239 = vmatprep.subr.mxu0 0.0
    %240 = vmatpush1.xpose.msra.mxu0 0.0
    %241 = vmatprep.subr.mxu0 0.0
    %242 = vmatpush1.xpose.msra.mxu0 0.0
    %243 = vmatprep.subr.mxu0 0.0
    %244 = vmatpush1.xpose.msra.mxu0 0.0
    %245 = vmatprep.subr.mxu0 0.0
    %246 = vmatpush1.xpose.msra.mxu0 0.0
    %247 = vmatprep.subr.mxu0 0.0
    %248 = vmatpush1.xpose.msra.mxu0 0.0
    %249 = vmatprep.subr.mxu0 0.0
    %250 = vmatpush1.xpose.msra.mxu0 0.0
    %251 = vmatprep.subr.mxu0 0.0
    %252 = vmatpush1.xpose.msra.mxu0 0.0
    %253 = vmatprep.subr.mxu0 0.0
    %254 = vmatpush1.xpose.msra.mxu0 0.0
    %255 = vmatprep.subr.mxu0 0.0
    %256 = vmatpush1.xpose.msra.mxu0 0.0
    %257 = vmatprep.subr.mxu0 0.0
    %258 = vmatpush1.xpose.msra.mxu0 0.0
    %259 = vmatprep.subr.mxu0 0.0
    %260 = vmatpush1.xpose.msra.mxu0 0.0
    %261 = vmatprep.subr.mxu0 0.0
    %262 = vmatpush1.xpose.msra.mxu0 0.0
    %263 = vmatprep.subr.mxu0 0.0
    %264 = vmatpush1.xpose.msra.mxu0 0.0
    %265 = vmatprep.subr.mxu0 0.0
    %266 = vmatpush1.xpose.msra.mxu0 0.0
    %267 = vmatprep.subr.mxu0 0.0
    %268 = vmatpush1.xpose.msra.mxu0 0.0
    %269 = vmatprep.subr.mxu0 0.0
    %270 = vmatpush1.xpose.msra.mxu0 %v237
    %271 = vmatprep.subr.mxu0 0.0
    %272 = vmatpush2.xpose.msra.mxu0 0.0
    %273 = vmatprep.subr.mxu0 0.0
    %274 = vmatpush2.xpose.msra.mxu0 0.0
    %275 = vmatprep.subr.mxu0 0.0
    %276 = vmatpush2.xpose.msra.mxu0 0.0
    %277 = vmatprep.subr.mxu0 0.0
    %278 = vmatpush2.xpose.msra.mxu0 0.0
    %279 = vmatprep.subr.mxu0 0.0
    %280 = vmatpush2.xpose.msra.mxu0 0.0
    %281 = vmatprep.subr.mxu0 0.0
    %282 = vmatpush2.xpose.msra.mxu0 0.0
    %283 = vmatprep.subr.mxu0 0.0
    %284 = vmatpush2.xpose.msra.mxu0 0.0
    %285 = vmatprep.subr.mxu0 0.0
    %286 = vmatpush2.xpose.msra.mxu0 0.0
    %287 = vmatprep.subr.mxu0 0.0
    %288 = vmatpush2.xpose.msra.mxu0 0.0
    %289 = vmatprep.subr.mxu0 0.0
    %290 = vmatpush2.xpose.msra.mxu0 0.0
    %291 = vmatprep.subr.mxu0 0.0
    %292 = vmatpush2.xpose.msra.mxu0 0.0
    %293 = vmatprep.subr.mxu0 0.0
    %294 = vmatpush2.xpose.msra.mxu0 0.0
    %295 = vmatprep.subr.mxu0 0.0
    %296 = vmatpush2.xpose.msra.mxu0 0.0
    %297 = vmatprep.subr.mxu0 0.0
    %298 = vmatpush2.xpose.msra.mxu0 0.0
    %299 = vmatprep.subr.mxu0 0.0
    %300 = vmatpush2.xpose.msra.mxu0 0.0
    %301 = vmatprep.subr.mxu0 0.0
    %302 = vmatpush2.xpose.msra.mxu0 0.0
    %303 = vmatprep.mubr.f32.mxu0 0.0
    %304 = vmatmul.mubr.f32.gmra.mxu0 %v235
    %v305 = vpop.f32.mrf.mxu0
    %v306 = vadd.f32 0.0, %v305
    %v307 = vpop.f32.mrf.mxu0
    %308 = vdwg.mxu0
    %v309 = vmin.f32 %v229, %v143
    %v310 = vmin.f32 %v306, %v144
    %v311 = vsel %vm157, %v309, -inf
    %312 = vmax.xlane.f32.xlu0 %v311
    %v313 = vpop.xlane.xlu0 %312
    %v314 = vsel %vm157, %v310, -inf
    %315 = vmax.xlane.f32.xlu0 %v314
    %v316 = vpop.xlane.xlu0 %315
    %v317 = vsub.f32 %v309, %v313
    %v318 = vsub.f32 %v310, %v316
    %v319 = vmul.f32 %v317, 1.442695
    %v320 = vpow.pop %v319
    %v321 = vmul.f32 %v318, 1.442695
    %v322 = vpow.pop %v321
    %v323 = vsel %vm157, %v320, 0.0
    %324 = vadd.xlane.f32.xlu0 %v323
    %v325 = vpop.xlane.xlu0 %324
    %v326 = vsel %vm157, %v322, 0.0
    %327 = vadd.xlane.f32.xlu0 %v326
    %v328 = vpop.xlane.xlu0 %327
    %v329 = vrcp.pop %v325
    %v330 = vrcp.pop %v328
    %v331 = vmul.f32 %v320, %v329
    %v332 = vmul.f32 %v322, %v330
    %333 = vrot.lane.b32.xlu0 %v135, 64
    %v334 = vpop.permute.xlu0 %333
    %v337 = vsel %vm157, %v331, 0
    %339 = vmatprep.subr.mxu0 0.0
    %340 = vmatpush1.msra.mxu0 0.0
    %341 = vmatprep.subr.mxu0 0.0
    %342 = vmatpush1.msra.mxu0 0.0
    %343 = vmatprep.subr.mxu0 0.0
    %344 = vmatpush1.msra.mxu0 0.0
    %345 = vmatprep.subr.mxu0 0.0
    %346 = vmatpush1.msra.mxu0 0.0
    %347 = vmatprep.subr.mxu0 0.0
    %348 = vmatpush1.msra.mxu0 0.0
    %349 = vmatprep.subr.mxu0 0.0
    %350 = vmatpush1.msra.mxu0 0.0
    %351 = vmatprep.subr.mxu0 0.0
    %352 = vmatpush1.msra.mxu0 0.0
    %353 = vmatprep.subr.mxu0 0.0
    %354 = vmatpush1.msra.mxu0 0.0
    %355 = vmatprep.subr.mxu0 0.0
    %356 = vmatpush1.msra.mxu0 0.0
    %357 = vmatprep.subr.mxu0 0.0
    %358 = vmatpush1.msra.mxu0 0.0
    %359 = vmatprep.subr.mxu0 0.0
    %360 = vmatpush1.msra.mxu0 0.0
    %361 = vmatprep.subr.mxu0 0.0
    %362 = vmatpush1.msra.mxu0 0.0
    %363 = vmatprep.subr.mxu0 0.0
    %364 = vmatpush1.msra.mxu0 0.0
    %365 = vmatprep.subr.mxu0 0.0
    %366 = vmatpush1.msra.mxu0 0.0
    %367 = vmatprep.subr.mxu0 0.0
    %368 = vmatpush1.msra.mxu0 0.0
    %369 = vmatprep.subr.mxu0 0.0
    %370 = vmatpush1.msra.mxu0 %v334
    %371 = vmatprep.subr.mxu0 0.0
    %372 = vmatpush2.msra.mxu0 0.0
    %373 = vmatprep.subr.mxu0 0.0
    %374 = vmatpush2.msra.mxu0 0.0
    %375 = vmatprep.subr.mxu0 0.0
    %376 = vmatpush2.msra.mxu0 0.0
    %377 = vmatprep.subr.mxu0 0.0
    %378 = vmatpush2.msra.mxu0 0.0
    %379 = vmatprep.subr.mxu0 0.0
    %380 = vmatpush2.msra.mxu0 0.0
    %381 = vmatprep.subr.mxu0 0.0
    %382 = vmatpush2.msra.mxu0 0.0
    %383 = vmatprep.subr.mxu0 0.0
    %384 = vmatpush2.msra.mxu0 0.0
    %385 = vmatprep.subr.mxu0 0.0
    %386 = vmatpush2.msra.mxu0 0.0
    %387 = vmatprep.subr.mxu0 0.0
    %388 = vmatpush2.msra.mxu0 0.0
    %389 = vmatprep.subr.mxu0 0.0
    %390 = vmatpush2.msra.mxu0 0.0
    %391 = vmatprep.subr.mxu0 0.0
    %392 = vmatpush2.msra.mxu0 0.0
    %393 = vmatprep.subr.mxu0 0.0
    %394 = vmatpush2.msra.mxu0 0.0
    %395 = vmatprep.subr.mxu0 0.0
    %396 = vmatpush2.msra.mxu0 0.0
    %397 = vmatprep.subr.mxu0 0.0
    %398 = vmatpush2.msra.mxu0 0.0
    %399 = vmatprep.subr.mxu0 0.0
    %400 = vmatpush2.msra.mxu0 0.0
    %401 = vmatprep.subr.mxu0 0.0
    %402 = vmatpush2.msra.mxu0 0.0
    %403 = vmatprep.mubr.f32.mxu0 0.0
    %404 = vmatmul.mubr.f32.gmra.mxu0 %v337
    %v405 = vpop.f32.mrf.mxu0
    %v406 = vadd.f32 0.0, %v405
    %v407 = vpop.f32.mrf.mxu0
    %408 = vdwg.mxu0
    %409 = vrot.lane.b32.xlu0 %v140, 64
    %v410 = vpop.permute.xlu0 %409
    %v413 = vsel %vm157, %v332, 0
    %415 = vmatprep.subr.mxu0 0.0
    %416 = vmatpush1.msra.mxu0 0.0
    %417 = vmatprep.subr.mxu0 0.0
    %418 = vmatpush1.msra.mxu0 0.0
    %419 = vmatprep.subr.mxu0 0.0
    %420 = vmatpush1.msra.mxu0 0.0
    %421 = vmatprep.subr.mxu0 0.0
    %422 = vmatpush1.msra.mxu0 0.0
    %423 = vmatprep.subr.mxu0 0.0
    %424 = vmatpush1.msra.mxu0 0.0
    %425 = vmatprep.subr.mxu0 0.0
    %426 = vmatpush1.msra.mxu0 0.0
    %427 = vmatprep.subr.mxu0 0.0
    %428 = vmatpush1.msra.mxu0 0.0
    %429 = vmatprep.subr.mxu0 0.0
    %430 = vmatpush1.msra.mxu0 0.0
    %431 = vmatprep.subr.mxu0 0.0
    %432 = vmatpush1.msra.mxu0 0.0
    %433 = vmatprep.subr.mxu0 0.0
    %434 = vmatpush1.msra.mxu0 0.0
    %435 = vmatprep.subr.mxu0 0.0
    %436 = vmatpush1.msra.mxu0 0.0
    %437 = vmatprep.subr.mxu0 0.0
    %438 = vmatpush1.msra.mxu0 0.0
    %439 = vmatprep.subr.mxu0 0.0
    %440 = vmatpush1.msra.mxu0 0.0
    %441 = vmatprep.subr.mxu0 0.0
    %442 = vmatpush1.msra.mxu0 0.0
    %443 = vmatprep.subr.mxu0 0.0
    %444 = vmatpush1.msra.mxu0 0.0
    %445 = vmatprep.subr.mxu0 0.0
    %446 = vmatpush1.msra.mxu0 %v410
    %447 = vmatprep.subr.mxu0 0.0
    %448 = vmatpush2.msra.mxu0 0.0
    %449 = vmatprep.subr.mxu0 0.0
    %450 = vmatpush2.msra.mxu0 0.0
    %451 = vmatprep.subr.mxu0 0.0
    %452 = vmatpush2.msra.mxu0 0.0
    %453 = vmatprep.subr.mxu0 0.0
    %454 = vmatpush2.msra.mxu0 0.0
    %455 = vmatprep.subr.mxu0 0.0
    %456 = vmatpush2.msra.mxu0 0.0
    %457 = vmatprep.subr.mxu0 0.0
    %458 = vmatpush2.msra.mxu0 0.0
    %459 = vmatprep.subr.mxu0 0.0
    %460 = vmatpush2.msra.mxu0 0.0
    %461 = vmatprep.subr.mxu0 0.0
    %462 = vmatpush2.msra.mxu0 0.0
    %463 = vmatprep.subr.mxu0 0.0
    %464 = vmatpush2.msra.mxu0 0.0
    %465 = vmatprep.subr.mxu0 0.0
    %466 = vmatpush2.msra.mxu0 0.0
    %467 = vmatprep.subr.mxu0 0.0
    %468 = vmatpush2.msra.mxu0 0.0
    %469 = vmatprep.subr.mxu0 0.0
    %470 = vmatpush2.msra.mxu0 0.0
    %471 = vmatprep.subr.mxu0 0.0
    %472 = vmatpush2.msra.mxu0 0.0
    %473 = vmatprep.subr.mxu0 0.0
    %474 = vmatpush2.msra.mxu0 0.0
    %475 = vmatprep.subr.mxu0 0.0
    %476 = vmatpush2.msra.mxu0 0.0
    %477 = vmatprep.subr.mxu0 0.0
    %478 = vmatpush2.msra.mxu0 0.0
    %479 = vmatprep.mubr.f32.mxu0 0.0
    %480 = vmatmul.mubr.f32.gmra.mxu0 %v413
    %v481 = vpop.f32.mrf.mxu0
    %v482 = vadd.f32 0.0, %v481
    %v483 = vpop.f32.mrf.mxu0
    %484 = vdwg.mxu0
    %v485 = vld [vmem:[%s4] sm:$0xff]
    %v487 = vsel %vm157, %v406, 0
    %v490 = vsel %vm157, %v482, 0
    %492 = vmatprep.subr.mxu0 0.0
    %493 = vmatpush1.msra.mxu0 0.0
    %494 = vmatprep.subr.mxu0 0.0
    %495 = vmatpush1.msra.mxu0 0.0
    %496 = vmatprep.subr.mxu0 0.0
    %497 = vmatpush1.msra.mxu0 0.0
    %498 = vmatprep.subr.mxu0 0.0
    %499 = vmatpush1.msra.mxu0 0.0
    %500 = vmatprep.subr.mxu0 0.0
    %501 = vmatpush1.msra.mxu0 0.0
    %502 = vmatprep.subr.mxu0 0.0
    %503 = vmatpush1.msra.mxu0 0.0
    %504 = vmatprep.subr.mxu0 0.0
    %505 = vmatpush1.msra.mxu0 0.0
    %506 = vmatprep.subr.mxu0 0.0
    %507 = vmatpush1.msra.mxu0 0.0
    %508 = vmatprep.subr.mxu0 0.0
    %509 = vmatpush1.msra.mxu0 0.0
    %510 = vmatprep.subr.mxu0 0.0
    %511 = vmatpush1.msra.mxu0 0.0
    %512 = vmatprep.subr.mxu0 0.0
    %513 = vmatpush1.msra.mxu0 0.0
    %514 = vmatprep.subr.mxu0 0.0
    %515 = vmatpush1.msra.mxu0 0.0
    %516 = vmatprep.subr.mxu0 0.0
    %517 = vmatpush1.msra.mxu0 0.0
    %518 = vmatprep.subr.mxu0 0.0
    %519 = vmatpush1.msra.mxu0 0.0
    %520 = vmatprep.subr.mxu0 0.0
    %521 = vmatpush1.msra.mxu0 0.0
    %522 = vmatprep.subr.mxu0 0.0
    %523 = vmatpush1.msra.mxu0 %v485
    %524 = vmatprep.subr.mxu0 0.0
    %525 = vmatpush2.msra.mxu0 0.0
    %526 = vmatprep.subr.mxu0 0.0
    %527 = vmatpush2.msra.mxu0 0.0
    %528 = vmatprep.subr.mxu0 0.0
    %529 = vmatpush2.msra.mxu0 0.0
    %530 = vmatprep.subr.mxu0 0.0
    %531 = vmatpush2.msra.mxu0 0.0
    %532 = vmatprep.subr.mxu0 0.0
    %533 = vmatpush2.msra.mxu0 0.0
    %534 = vmatprep.subr.mxu0 0.0
    %535 = vmatpush2.msra.mxu0 0.0
    %536 = vmatprep.subr.mxu0 0.0
    %537 = vmatpush2.msra.mxu0 0.0
    %538 = vmatprep.subr.mxu0 0.0
    %539 = vmatpush2.msra.mxu0 0.0
    %540 = vmatprep.subr.mxu0 0.0
    %541 = vmatpush2.msra.mxu0 0.0
    %542 = vmatprep.subr.mxu0 0.0
    %543 = vmatpush2.msra.mxu0 0.0
    %544 = vmatprep.subr.mxu0 0.0
    %545 = vmatpush2.msra.mxu0 0.0
    %546 = vmatprep.subr.mxu0 0.0
    %547 = vmatpush2.msra.mxu0 0.0
    %548 = vmatprep.subr.mxu0 0.0
    %549 = vmatpush2.msra.mxu0 0.0
    %550 = vmatprep.subr.mxu0 0.0
    %551 = vmatpush2.msra.mxu0 0.0
    %552 = vmatprep.subr.mxu0 0.0
    %553 = vmatpush2.msra.mxu0 0.0
    %554 = vmatprep.subr.mxu0 0.0
    %555 = vmatpush2.msra.mxu0 0.0
    %556 = vmatprep.mubr.f32.mxu0 0.0
    %557 = vmatmul.mubr.f32.gmra.mxu0 %v487
    %v558 = vpop.f32.mrf.mxu0
    %v559 = vadd.f32 0.0, %v558
    %v560 = vpop.f32.mrf.mxu0
    %561 = vmatprep.mubr.f32.mxu0 0.0
    %562 = vmatmul.mubr.f32.gmra.mxu0 %v490
    %v563 = vpop.f32.mrf.mxu0
    %v564 = vadd.f32 0.0, %v563
    %v565 = vpop.f32.mrf.mxu0
    %566 = vdwg.mxu0
    %v567 = vadd.f32 %v152, %v559
    %v568 = vadd.f32 %v153, %v564
    %569 = vrot.lane.b32.xlu0 %v135, 120
    %v570 = vpop.permute.xlu0 %569
    %571 = vrot.lane.b32.xlu0 %v135, 88
    %v572 = vpop.permute.xlu0 %571
    %v573 = vsel %vm157, %v570, 0
    %v575 = vsel %vm157, %v572, 0
    %577 = vmatprep.subr.mxu0 0.0
    %578 = vmatpush1.xpose.msra.mxu0 0.0
    %579 = vmatprep.subr.mxu0 0.0
    %580 = vmatpush1.xpose.msra.mxu0 0.0
    %581 = vmatprep.subr.mxu0 0.0
    %582 = vmatpush1.xpose.msra.mxu0 0.0
    %583 = vmatprep.subr.mxu0 0.0
    %584 = vmatpush1.xpose.msra.mxu0 0.0
    %585 = vmatprep.subr.mxu0 0.0
    %586 = vmatpush1.xpose.msra.mxu0 0.0
    %587 = vmatprep.subr.mxu0 0.0
    %588 = vmatpush1.xpose.msra.mxu0 0.0
    %589 = vmatprep.subr.mxu0 0.0
    %590 = vmatpush1.xpose.msra.mxu0 0.0
    %591 = vmatprep.subr.mxu0 0.0
    %592 = vmatpush1.xpose.msra.mxu0 0.0
    %593 = vmatprep.subr.mxu0 0.0
    %594 = vmatpush1.xpose.msra.mxu0 0.0
    %595 = vmatprep.subr.mxu0 0.0
    %596 = vmatpush1.xpose.msra.mxu0 0.0
    %597 = vmatprep.subr.mxu0 0.0
    %598 = vmatpush1.xpose.msra.mxu0 0.0
    %599 = vmatprep.subr.mxu0 0.0
    %600 = vmatpush1.xpose.msra.mxu0 0.0
    %601 = vmatprep.subr.mxu0 0.0
    %602 = vmatpush1.xpose.msra.mxu0 0.0
    %603 = vmatprep.subr.mxu0 0.0
    %604 = vmatpush1.xpose.msra.mxu0 0.0
    %605 = vmatprep.subr.mxu0 0.0
    %606 = vmatpush1.xpose.msra.mxu0 0.0
    %607 = vmatprep.subr.mxu0 0.0
    %608 = vmatpush1.xpose.msra.mxu0 %v575
    %609 = vmatprep.subr.mxu0 0.0
    %610 = vmatpush2.xpose.msra.mxu0 0.0
    %611 = vmatprep.subr.mxu0 0.0
    %612 = vmatpush2.xpose.msra.mxu0 0.0
    %613 = vmatprep.subr.mxu0 0.0
    %614 = vmatpush2.xpose.msra.mxu0 0.0
    %615 = vmatprep.subr.mxu0 0.0
    %616 = vmatpush2.xpose.msra.mxu0 0.0
    %617 = vmatprep.subr.mxu0 0.0
    %618 = vmatpush2.xpose.msra.mxu0 0.0
    %619 = vmatprep.subr.mxu0 0.0
    %620 = vmatpush2.xpose.msra.mxu0 0.0
    %621 = vmatprep.subr.mxu0 0.0
    %622 = vmatpush2.xpose.msra.mxu0 0.0
    %623 = vmatprep.subr.mxu0 0.0
    %624 = vmatpush2.xpose.msra.mxu0 0.0
    %625 = vmatprep.subr.mxu0 0.0
    %626 = vmatpush2.xpose.msra.mxu0 0.0
    %627 = vmatprep.subr.mxu0 0.0
    %628 = vmatpush2.xpose.msra.mxu0 0.0
    %629 = vmatprep.subr.mxu0 0.0
    %630 = vmatpush2.xpose.msra.mxu0 0.0
    %631 = vmatprep.subr.mxu0 0.0
    %632 = vmatpush2.xpose.msra.mxu0 0.0
    %633 = vmatprep.subr.mxu0 0.0
    %634 = vmatpush2.xpose.msra.mxu0 0.0
    %635 = vmatprep.subr.mxu0 0.0
    %636 = vmatpush2.xpose.msra.mxu0 0.0
    %637 = vmatprep.subr.mxu0 0.0
    %638 = vmatpush2.xpose.msra.mxu0 0.0
    %639 = vmatprep.subr.mxu0 0.0
    %640 = vmatpush2.xpose.msra.mxu0 0.0
    %641 = vmatprep.mubr.f32.mxu0 0.0
    %642 = vmatmul.mubr.f32.gmra.mxu0 %v573
    %v643 = vpop.f32.mrf.mxu0
    %v644 = vadd.f32 0.0, %v643
    %v645 = vpop.f32.mrf.mxu0
    %646 = vdwg.mxu0
    %647 = vrot.lane.b32.xlu0 %v140, 120
    %v648 = vpop.permute.xlu0 %647
    %649 = vrot.lane.b32.xlu0 %v140, 88
    %v650 = vpop.permute.xlu0 %649
    %v651 = vsel %vm157, %v648, 0
    %v653 = vsel %vm157, %v650, 0
    %655 = vmatprep.subr.mxu0 0.0
    %656 = vmatpush1.xpose.msra.mxu0 0.0
    %657 = vmatprep.subr.mxu0 0.0
    %658 = vmatpush1.xpose.msra.mxu0 0.0
    %659 = vmatprep.subr.mxu0 0.0
    %660 = vmatpush1.xpose.msra.mxu0 0.0
    %661 = vmatprep.subr.mxu0 0.0
    %662 = vmatpush1.xpose.msra.mxu0 0.0
    %663 = vmatprep.subr.mxu0 0.0
    %664 = vmatpush1.xpose.msra.mxu0 0.0
    %665 = vmatprep.subr.mxu0 0.0
    %666 = vmatpush1.xpose.msra.mxu0 0.0
    %667 = vmatprep.subr.mxu0 0.0
    %668 = vmatpush1.xpose.msra.mxu0 0.0
    %669 = vmatprep.subr.mxu0 0.0
    %670 = vmatpush1.xpose.msra.mxu0 0.0
    %671 = vmatprep.subr.mxu0 0.0
    %672 = vmatpush1.xpose.msra.mxu0 0.0
    %673 = vmatprep.subr.mxu0 0.0
    %674 = vmatpush1.xpose.msra.mxu0 0.0
    %675 = vmatprep.subr.mxu0 0.0
    %676 = vmatpush1.xpose.msra.mxu0 0.0
    %677 = vmatprep.subr.mxu0 0.0
    %678 = vmatpush1.xpose.msra.mxu0 0.0
    %679 = vmatprep.subr.mxu0 0.0
    %680 = vmatpush1.xpose.msra.mxu0 0.0
    %681 = vmatprep.subr.mxu0 0.0
    %682 = vmatpush1.xpose.msra.mxu0 0.0
    %683 = vmatprep.subr.mxu0 0.0
    %684 = vmatpush1.xpose.msra.mxu0 0.0
    %685 = vmatprep.subr.mxu0 0.0
    %686 = vmatpush1.xpose.msra.mxu0 %v653
    %687 = vmatprep.subr.mxu0 0.0
    %688 = vmatpush2.xpose.msra.mxu0 0.0
    %689 = vmatprep.subr.mxu0 0.0
    %690 = vmatpush2.xpose.msra.mxu0 0.0
    %691 = vmatprep.subr.mxu0 0.0
    %692 = vmatpush2.xpose.msra.mxu0 0.0
    %693 = vmatprep.subr.mxu0 0.0
    %694 = vmatpush2.xpose.msra.mxu0 0.0
    %695 = vmatprep.subr.mxu0 0.0
    %696 = vmatpush2.xpose.msra.mxu0 0.0
    %697 = vmatprep.subr.mxu0 0.0
    %698 = vmatpush2.xpose.msra.mxu0 0.0
    %699 = vmatprep.subr.mxu0 0.0
    %700 = vmatpush2.xpose.msra.mxu0 0.0
    %701 = vmatprep.subr.mxu0 0.0
    %702 = vmatpush2.xpose.msra.mxu0 0.0
    %703 = vmatprep.subr.mxu0 0.0
    %704 = vmatpush2.xpose.msra.mxu0 0.0
    %705 = vmatprep.subr.mxu0 0.0
    %706 = vmatpush2.xpose.msra.mxu0 0.0
    %707 = vmatprep.subr.mxu0 0.0
    %708 = vmatpush2.xpose.msra.mxu0 0.0
    %709 = vmatprep.subr.mxu0 0.0
    %710 = vmatpush2.xpose.msra.mxu0 0.0
    %711 = vmatprep.subr.mxu0 0.0
    %712 = vmatpush2.xpose.msra.mxu0 0.0
    %713 = vmatprep.subr.mxu0 0.0
    %714 = vmatpush2.xpose.msra.mxu0 0.0
    %715 = vmatprep.subr.mxu0 0.0
    %716 = vmatpush2.xpose.msra.mxu0 0.0
    %717 = vmatprep.subr.mxu0 0.0
    %718 = vmatpush2.xpose.msra.mxu0 0.0
    %719 = vmatprep.mubr.f32.mxu0 0.0
    %720 = vmatmul.mubr.f32.gmra.mxu0 %v651
    %v721 = vpop.f32.mrf.mxu0
    %v722 = vadd.f32 0.0, %v721
    %v723 = vpop.f32.mrf.mxu0
    %724 = vdwg.mxu0
    %v725 = vmin.f32 %v644, %v143
    %v726 = vmin.f32 %v722, %v144
    %v727 = vsel %vm157, %v725, -inf
    %728 = vmax.xlane.f32.xlu0 %v727
    %v729 = vpop.xlane.xlu0 %728
    %v730 = vsel %vm157, %v726, -inf
    %731 = vmax.xlane.f32.xlu0 %v730
    %v732 = vpop.xlane.xlu0 %731
    %v733 = vsub.f32 %v725, %v729
    %v734 = vsub.f32 %v726, %v732
    %v735 = vmul.f32 %v733, 1.442695
    %v736 = vpow.pop %v735
    %v737 = vmul.f32 %v734, 1.442695
    %v738 = vpow.pop %v737
    %v739 = vsel %vm157, %v736, 0.0
    %740 = vadd.xlane.f32.xlu0 %v739
    %v741 = vpop.xlane.xlu0 %740
    %v742 = vsel %vm157, %v738, 0.0
    %743 = vadd.xlane.f32.xlu0 %v742
    %v744 = vpop.xlane.xlu0 %743
    %v745 = vrcp.pop %v741
    %v746 = vrcp.pop %v744
    %v747 = vmul.f32 %v736, %v745
    %v748 = vmul.f32 %v738, %v746
    %749 = vrot.lane.b32.xlu0 %v135, 56
    %v750 = vpop.permute.xlu0 %749
    %v753 = vsel %vm157, %v747, 0
    %755 = vmatprep.subr.mxu0 0.0
    %756 = vmatpush1.msra.mxu0 0.0
    %757 = vmatprep.subr.mxu0 0.0
    %758 = vmatpush1.msra.mxu0 0.0
    %759 = vmatprep.subr.mxu0 0.0
    %760 = vmatpush1.msra.mxu0 0.0
    %761 = vmatprep.subr.mxu0 0.0
    %762 = vmatpush1.msra.mxu0 0.0
    %763 = vmatprep.subr.mxu0 0.0
    %764 = vmatpush1.msra.mxu0 0.0
    %765 = vmatprep.subr.mxu0 0.0
    %766 = vmatpush1.msra.mxu0 0.0
    %767 = vmatprep.subr.mxu0 0.0
    %768 = vmatpush1.msra.mxu0 0.0
    %769 = vmatprep.subr.mxu0 0.0
    %770 = vmatpush1.msra.mxu0 0.0
    %771 = vmatprep.subr.mxu0 0.0
    %772 = vmatpush1.msra.mxu0 0.0
    %773 = vmatprep.subr.mxu0 0.0
    %774 = vmatpush1.msra.mxu0 0.0
    %775 = vmatprep.subr.mxu0 0.0
    %776 = vmatpush1.msra.mxu0 0.0
    %777 = vmatprep.subr.mxu0 0.0
    %778 = vmatpush1.msra.mxu0 0.0
    %779 = vmatprep.subr.mxu0 0.0
    %780 = vmatpush1.msra.mxu0 0.0
    %781 = vmatprep.subr.mxu0 0.0
    %782 = vmatpush1.msra.mxu0 0.0
    %783 = vmatprep.subr.mxu0 0.0
    %784 = vmatpush1.msra.mxu0 0.0
    %785 = vmatprep.subr.mxu0 0.0
    %786 = vmatpush1.msra.mxu0 %v750
    %787 = vmatprep.subr.mxu0 0.0
    %788 = vmatpush2.msra.mxu0 0.0
    %789 = vmatprep.subr.mxu0 0.0
    %790 = vmatpush2.msra.mxu0 0.0
    %791 = vmatprep.subr.mxu0 0.0
    %792 = vmatpush2.msra.mxu0 0.0
    %793 = vmatprep.subr.mxu0 0.0
    %794 = vmatpush2.msra.mxu0 0.0
    %795 = vmatprep.subr.mxu0 0.0
    %796 = vmatpush2.msra.mxu0 0.0
    %797 = vmatprep.subr.mxu0 0.0
    %798 = vmatpush2.msra.mxu0 0.0
    %799 = vmatprep.subr.mxu0 0.0
    %800 = vmatpush2.msra.mxu0 0.0
    %801 = vmatprep.subr.mxu0 0.0
    %802 = vmatpush2.msra.mxu0 0.0
    %803 = vmatprep.subr.mxu0 0.0
    %804 = vmatpush2.msra.mxu0 0.0
    %805 = vmatprep.subr.mxu0 0.0
    %806 = vmatpush2.msra.mxu0 0.0
    %807 = vmatprep.subr.mxu0 0.0
    %808 = vmatpush2.msra.mxu0 0.0
    %809 = vmatprep.subr.mxu0 0.0
    %810 = vmatpush2.msra.mxu0 0.0
    %811 = vmatprep.subr.mxu0 0.0
    %812 = vmatpush2.msra.mxu0 0.0
    %813 = vmatprep.subr.mxu0 0.0
    %814 = vmatpush2.msra.mxu0 0.0
    %815 = vmatprep.subr.mxu0 0.0
    %816 = vmatpush2.msra.mxu0 0.0
    %817 = vmatprep.subr.mxu0 0.0
    %818 = vmatpush2.msra.mxu0 0.0
    %819 = vmatprep.mubr.f32.mxu0 0.0
    %820 = vmatmul.mubr.f32.gmra.mxu0 %v753
    %v821 = vpop.f32.mrf.mxu0
    %v822 = vadd.f32 0.0, %v821
    %v823 = vpop.f32.mrf.mxu0
    %824 = vdwg.mxu0
    %825 = vrot.lane.b32.xlu0 %v140, 56
    %v826 = vpop.permute.xlu0 %825
    %v829 = vsel %vm157, %v748, 0
    %831 = vmatprep.subr.mxu0 0.0
    %832 = vmatpush1.msra.mxu0 0.0
    %833 = vmatprep.subr.mxu0 0.0
    %834 = vmatpush1.msra.mxu0 0.0
    %835 = vmatprep.subr.mxu0 0.0
    %836 = vmatpush1.msra.mxu0 0.0
    %837 = vmatprep.subr.mxu0 0.0
    %838 = vmatpush1.msra.mxu0 0.0
    %839 = vmatprep.subr.mxu0 0.0
    %840 = vmatpush1.msra.mxu0 0.0
    %841 = vmatprep.subr.mxu0 0.0
    %842 = vmatpush1.msra.mxu0 0.0
    %843 = vmatprep.subr.mxu0 0.0
    %844 = vmatpush1.msra.mxu0 0.0
    %845 = vmatprep.subr.mxu0 0.0
    %846 = vmatpush1.msra.mxu0 0.0
    %847 = vmatprep.subr.mxu0 0.0
    %848 = vmatpush1.msra.mxu0 0.0
    %849 = vmatprep.subr.mxu0 0.0
    %850 = vmatpush1.msra.mxu0 0.0
    %851 = vmatprep.subr.mxu0 0.0
    %852 = vmatpush1.msra.mxu0 0.0
    %853 = vmatprep.subr.mxu0 0.0
    %854 = vmatpush1.msra.mxu0 0.0
    %855 = vmatprep.subr.mxu0 0.0
    %856 = vmatpush1.msra.mxu0 0.0
    %857 = vmatprep.subr.mxu0 0.0
    %858 = vmatpush1.msra.mxu0 0.0
    %859 = vmatprep.subr.mxu0 0.0
    %860 = vmatpush1.msra.mxu0 0.0
    %861 = vmatprep.subr.mxu0 0.0
    %862 = vmatpush1.msra.mxu0 %v826
    %863 = vmatprep.subr.mxu0 0.0
    %864 = vmatpush2.msra.mxu0 0.0
    %865 = vmatprep.subr.mxu0 0.0
    %866 = vmatpush2.msra.mxu0 0.0
    %867 = vmatprep.subr.mxu0 0.0
    %868 = vmatpush2.msra.mxu0 0.0
    %869 = vmatprep.subr.mxu0 0.0
    %870 = vmatpush2.msra.mxu0 0.0
    %871 = vmatprep.subr.mxu0 0.0
    %872 = vmatpush2.msra.mxu0 0.0
    %873 = vmatprep.subr.mxu0 0.0
    %874 = vmatpush2.msra.mxu0 0.0
    %875 = vmatprep.subr.mxu0 0.0
    %876 = vmatpush2.msra.mxu0 0.0
    %877 = vmatprep.subr.mxu0 0.0
    %878 = vmatpush2.msra.mxu0 0.0
    %879 = vmatprep.subr.mxu0 0.0
    %880 = vmatpush2.msra.mxu0 0.0
    %881 = vmatprep.subr.mxu0 0.0
    %882 = vmatpush2.msra.mxu0 0.0
    %883 = vmatprep.subr.mxu0 0.0
    %884 = vmatpush2.msra.mxu0 0.0
    %885 = vmatprep.subr.mxu0 0.0
    %886 = vmatpush2.msra.mxu0 0.0
    %887 = vmatprep.subr.mxu0 0.0
    %888 = vmatpush2.msra.mxu0 0.0
    %889 = vmatprep.subr.mxu0 0.0
    %890 = vmatpush2.msra.mxu0 0.0
    %891 = vmatprep.subr.mxu0 0.0
    %892 = vmatpush2.msra.mxu0 0.0
    %893 = vmatprep.subr.mxu0 0.0
    %894 = vmatpush2.msra.mxu0 0.0
    %895 = vmatprep.mubr.f32.mxu0 0.0
    %896 = vmatmul.mubr.f32.gmra.mxu0 %v829
    %v897 = vpop.f32.mrf.mxu0
    %v898 = vadd.f32 0.0, %v897
    %v899 = vpop.f32.mrf.mxu0
    %900 = vdwg.mxu0
    %v901 = vld [vmem:[%s4 + $0x8] sm:$0xff]
    %v903 = vsel %vm157, %v822, 0
    %v906 = vsel %vm157, %v898, 0
    %908 = vmatprep.subr.mxu0 0.0
    %909 = vmatpush1.msra.mxu0 0.0
    %910 = vmatprep.subr.mxu0 0.0
    %911 = vmatpush1.msra.mxu0 0.0
    %912 = vmatprep.subr.mxu0 0.0
    %913 = vmatpush1.msra.mxu0 0.0
    %914 = vmatprep.subr.mxu0 0.0
    %915 = vmatpush1.msra.mxu0 0.0
    %916 = vmatprep.subr.mxu0 0.0
    %917 = vmatpush1.msra.mxu0 0.0
    %918 = vmatprep.subr.mxu0 0.0
    %919 = vmatpush1.msra.mxu0 0.0
    %920 = vmatprep.subr.mxu0 0.0
    %921 = vmatpush1.msra.mxu0 0.0
    %922 = vmatprep.subr.mxu0 0.0
    %923 = vmatpush1.msra.mxu0 0.0
    %924 = vmatprep.subr.mxu0 0.0
    %925 = vmatpush1.msra.mxu0 0.0
    %926 = vmatprep.subr.mxu0 0.0
    %927 = vmatpush1.msra.mxu0 0.0
    %928 = vmatprep.subr.mxu0 0.0
    %929 = vmatpush1.msra.mxu0 0.0
    %930 = vmatprep.subr.mxu0 0.0
    %931 = vmatpush1.msra.mxu0 0.0
    %932 = vmatprep.subr.mxu0 0.0
    %933 = vmatpush1.msra.mxu0 0.0
    %934 = vmatprep.subr.mxu0 0.0
    %935 = vmatpush1.msra.mxu0 0.0
    %936 = vmatprep.subr.mxu0 0.0
    %937 = vmatpush1.msra.mxu0 0.0
    %938 = vmatprep.subr.mxu0 0.0
    %939 = vmatpush1.msra.mxu0 %v901
    %940 = vmatprep.subr.mxu0 0.0
    %941 = vmatpush2.msra.mxu0 0.0
    %942 = vmatprep.subr.mxu0 0.0
    %943 = vmatpush2.msra.mxu0 0.0
    %944 = vmatprep.subr.mxu0 0.0
    %945 = vmatpush2.msra.mxu0 0.0
    %946 = vmatprep.subr.mxu0 0.0
    %947 = vmatpush2.msra.mxu0 0.0
    %948 = vmatprep.subr.mxu0 0.0
    %949 = vmatpush2.msra.mxu0 0.0
    %950 = vmatprep.subr.mxu0 0.0
    %951 = vmatpush2.msra.mxu0 0.0
    %952 = vmatprep.subr.mxu0 0.0
    %953 = vmatpush2.msra.mxu0 0.0
    %954 = vmatprep.subr.mxu0 0.0
    %955 = vmatpush2.msra.mxu0 0.0
    %956 = vmatprep.subr.mxu0 0.0
    %957 = vmatpush2.msra.mxu0 0.0
    %958 = vmatprep.subr.mxu0 0.0
    %959 = vmatpush2.msra.mxu0 0.0
    %960 = vmatprep.subr.mxu0 0.0
    %961 = vmatpush2.msra.mxu0 0.0
    %962 = vmatprep.subr.mxu0 0.0
    %963 = vmatpush2.msra.mxu0 0.0
    %964 = vmatprep.subr.mxu0 0.0
    %965 = vmatpush2.msra.mxu0 0.0
    %966 = vmatprep.subr.mxu0 0.0
    %967 = vmatpush2.msra.mxu0 0.0
    %968 = vmatprep.subr.mxu0 0.0
    %969 = vmatpush2.msra.mxu0 0.0
    %970 = vmatprep.subr.mxu0 0.0
    %971 = vmatpush2.msra.mxu0 0.0
    %972 = vmatprep.mubr.f32.mxu0 0.0
    %973 = vmatmul.mubr.f32.gmra.mxu0 %v903
    %v974 = vpop.f32.mrf.mxu0
    %v975 = vadd.f32 0.0, %v974
    %v976 = vpop.f32.mrf.mxu0
    %977 = vmatprep.mubr.f32.mxu0 0.0
    %978 = vmatmul.mubr.f32.gmra.mxu0 %v906
    %v979 = vpop.f32.mrf.mxu0
    %v980 = vadd.f32 0.0, %v979
    %v981 = vpop.f32.mrf.mxu0
    %982 = vdwg.mxu0
    %v983 = vadd.f32 %v567, %v975
    %v984 = vadd.f32 %v568, %v980
    %985 = vrot.lane.b32.xlu0 %v135, 112
    %v986 = vpop.permute.xlu0 %985
    %987 = vrot.lane.b32.xlu0 %v135, 80
    %v988 = vpop.permute.xlu0 %987
    %v989 = vsel %vm157, %v986, 0
    %v991 = vsel %vm157, %v988, 0
    %993 = vmatprep.subr.mxu0 0.0
    %994 = vmatpush1.xpose.msra.mxu0 0.0
    %995 = vmatprep.subr.mxu0 0.0
    %996 = vmatpush1.xpose.msra.mxu0 0.0
    %997 = vmatprep.subr.mxu0 0.0
    %998 = vmatpush1.xpose.msra.mxu0 0.0
    %999 = vmatprep.subr.mxu0 0.0
    %1000 = vmatpush1.xpose.msra.mxu0 0.0
    %1001 = vmatprep.subr.mxu0 0.0
    %1002 = vmatpush1.xpose.msra.mxu0 0.0
    %1003 = vmatprep.subr.mxu0 0.0
    %1004 = vmatpush1.xpose.msra.mxu0 0.0
    %1005 = vmatprep.subr.mxu0 0.0
    %1006 = vmatpush1.xpose.msra.mxu0 0.0
    %1007 = vmatprep.subr.mxu0 0.0
    %1008 = vmatpush1.xpose.msra.mxu0 0.0
    %1009 = vmatprep.subr.mxu0 0.0
    %1010 = vmatpush1.xpose.msra.mxu0 0.0
    %1011 = vmatprep.subr.mxu0 0.0
    %1012 = vmatpush1.xpose.msra.mxu0 0.0
    %1013 = vmatprep.subr.mxu0 0.0
    %1014 = vmatpush1.xpose.msra.mxu0 0.0
    %1015 = vmatprep.subr.mxu0 0.0
    %1016 = vmatpush1.xpose.msra.mxu0 0.0
    %1017 = vmatprep.subr.mxu0 0.0
    %1018 = vmatpush1.xpose.msra.mxu0 0.0
    %1019 = vmatprep.subr.mxu0 0.0
    %1020 = vmatpush1.xpose.msra.mxu0 0.0
    %1021 = vmatprep.subr.mxu0 0.0
    %1022 = vmatpush1.xpose.msra.mxu0 0.0
    %1023 = vmatprep.subr.mxu0 0.0
    %1024 = vmatpush1.xpose.msra.mxu0 %v991
    %1025 = vmatprep.subr.mxu0 0.0
    %1026 = vmatpush2.xpose.msra.mxu0 0.0
    %1027 = vmatprep.subr.mxu0 0.0
    %1028 = vmatpush2.xpose.msra.mxu0 0.0
    %1029 = vmatprep.subr.mxu0 0.0
    %1030 = vmatpush2.xpose.msra.mxu0 0.0
    %1031 = vmatprep.subr.mxu0 0.0
    %1032 = vmatpush2.xpose.msra.mxu0 0.0
    %1033 = vmatprep.subr.mxu0 0.0
    %1034 = vmatpush2.xpose.msra.mxu0 0.0
    %1035 = vmatprep.subr.mxu0 0.0
    %1036 = vmatpush2.xpose.msra.mxu0 0.0
    %1037 = vmatprep.subr.mxu0 0.0
    %1038 = vmatpush2.xpose.msra.mxu0 0.0
    %1039 = vmatprep.subr.mxu0 0.0
    %1040 = vmatpush2.xpose.msra.mxu0 0.0
    %1041 = vmatprep.subr.mxu0 0.0
    %1042 = vmatpush2.xpose.msra.mxu0 0.0
    %1043 = vmatprep.subr.mxu0 0.0
    %1044 = vmatpush2.xpose.msra.mxu0 0.0
    %1045 = vmatprep.subr.mxu0 0.0
    %1046 = vmatpush2.xpose.msra.mxu0 0.0
    %1047 = vmatprep.subr.mxu0 0.0
    %1048 = vmatpush2.xpose.msra.mxu0 0.0
    %1049 = vmatprep.subr.mxu0 0.0
    %1050 = vmatpush2.xpose.msra.mxu0 0.0
    %1051 = vmatprep.subr.mxu0 0.0
    %1052 = vmatpush2.xpose.msra.mxu0 0.0
    %1053 = vmatprep.subr.mxu0 0.0
    %1054 = vmatpush2.xpose.msra.mxu0 0.0
    %1055 = vmatprep.subr.mxu0 0.0
    %1056 = vmatpush2.xpose.msra.mxu0 0.0
    %1057 = vmatprep.mubr.f32.mxu0 0.0
    %1058 = vmatmul.mubr.f32.gmra.mxu0 %v989
    %v1059 = vpop.f32.mrf.mxu0
    %v1060 = vadd.f32 0.0, %v1059
    %v1061 = vpop.f32.mrf.mxu0
    %1062 = vdwg.mxu0
    %1063 = vrot.lane.b32.xlu0 %v140, 112
    %v1064 = vpop.permute.xlu0 %1063
    %1065 = vrot.lane.b32.xlu0 %v140, 80
    %v1066 = vpop.permute.xlu0 %1065
    %v1067 = vsel %vm157, %v1064, 0
    %v1069 = vsel %vm157, %v1066, 0
    %1071 = vmatprep.subr.mxu0 0.0
    %1072 = vmatpush1.xpose.msra.mxu0 0.0
    %1073 = vmatprep.subr.mxu0 0.0
    %1074 = vmatpush1.xpose.msra.mxu0 0.0
    %1075 = vmatprep.subr.mxu0 0.0
    %1076 = vmatpush1.xpose.msra.mxu0 0.0
    %1077 = vmatprep.subr.mxu0 0.0
    %1078 = vmatpush1.xpose.msra.mxu0 0.0
    %1079 = vmatprep.subr.mxu0 0.0
    %1080 = vmatpush1.xpose.msra.mxu0 0.0
    %1081 = vmatprep.subr.mxu0 0.0
    %1082 = vmatpush1.xpose.msra.mxu0 0.0
    %1083 = vmatprep.subr.mxu0 0.0
    %1084 = vmatpush1.xpose.msra.mxu0 0.0
    %1085 = vmatprep.subr.mxu0 0.0
    %1086 = vmatpush1.xpose.msra.mxu0 0.0
    %1087 = vmatprep.subr.mxu0 0.0
    %1088 = vmatpush1.xpose.msra.mxu0 0.0
    %1089 = vmatprep.subr.mxu0 0.0
    %1090 = vmatpush1.xpose.msra.mxu0 0.0
    %1091 = vmatprep.subr.mxu0 0.0
    %1092 = vmatpush1.xpose.msra.mxu0 0.0
    %1093 = vmatprep.subr.mxu0 0.0
    %1094 = vmatpush1.xpose.msra.mxu0 0.0
    %1095 = vmatprep.subr.mxu0 0.0
    %1096 = vmatpush1.xpose.msra.mxu0 0.0
    %1097 = vmatprep.subr.mxu0 0.0
    %1098 = vmatpush1.xpose.msra.mxu0 0.0
    %1099 = vmatprep.subr.mxu0 0.0
    %1100 = vmatpush1.xpose.msra.mxu0 0.0
    %1101 = vmatprep.subr.mxu0 0.0
    %1102 = vmatpush1.xpose.msra.mxu0 %v1069
    %1103 = vmatprep.subr.mxu0 0.0
    %1104 = vmatpush2.xpose.msra.mxu0 0.0
    %1105 = vmatprep.subr.mxu0 0.0
    %1106 = vmatpush2.xpose.msra.mxu0 0.0
    %1107 = vmatprep.subr.mxu0 0.0
    %1108 = vmatpush2.xpose.msra.mxu0 0.0
    %1109 = vmatprep.subr.mxu0 0.0
    %1110 = vmatpush2.xpose.msra.mxu0 0.0
    %1111 = vmatprep.subr.mxu0 0.0
    %1112 = vmatpush2.xpose.msra.mxu0 0.0
    %1113 = vmatprep.subr.mxu0 0.0
    %1114 = vmatpush2.xpose.msra.mxu0 0.0
    %1115 = vmatprep.subr.mxu0 0.0
    %1116 = vmatpush2.xpose.msra.mxu0 0.0
    %1117 = vmatprep.subr.mxu0 0.0
    %1118 = vmatpush2.xpose.msra.mxu0 0.0
    %1119 = vmatprep.subr.mxu0 0.0
    %1120 = vmatpush2.xpose.msra.mxu0 0.0
    %1121 = vmatprep.subr.mxu0 0.0
    %1122 = vmatpush2.xpose.msra.mxu0 0.0
    %1123 = vmatprep.subr.mxu0 0.0
    %1124 = vmatpush2.xpose.msra.mxu0 0.0
    %1125 = vmatprep.subr.mxu0 0.0
    %1126 = vmatpush2.xpose.msra.mxu0 0.0
    %1127 = vmatprep.subr.mxu0 0.0
    %1128 = vmatpush2.xpose.msra.mxu0 0.0
    %1129 = vmatprep.subr.mxu0 0.0
    %1130 = vmatpush2.xpose.msra.mxu0 0.0
    %1131 = vmatprep.subr.mxu0 0.0
    %1132 = vmatpush2.xpose.msra.mxu0 0.0
    %1133 = vmatprep.subr.mxu0 0.0
    %1134 = vmatpush2.xpose.msra.mxu0 0.0
    %1135 = vmatprep.mubr.f32.mxu0 0.0
    %1136 = vmatmul.mubr.f32.gmra.mxu0 %v1067
    %v1137 = vpop.f32.mrf.mxu0
    %v1138 = vadd.f32 0.0, %v1137
    %v1139 = vpop.f32.mrf.mxu0
    %1140 = vdwg.mxu0
    %v1141 = vmin.f32 %v1060, %v143
    %v1142 = vmin.f32 %v1138, %v144
    %v1143 = vsel %vm157, %v1141, -inf
    %1144 = vmax.xlane.f32.xlu0 %v1143
    %v1145 = vpop.xlane.xlu0 %1144
    %v1146 = vsel %vm157, %v1142, -inf
    %1147 = vmax.xlane.f32.xlu0 %v1146
    %v1148 = vpop.xlane.xlu0 %1147
    %v1149 = vsub.f32 %v1141, %v1145
    %v1150 = vsub.f32 %v1142, %v1148
    %v1151 = vmul.f32 %v1149, 1.442695
    %v1152 = vpow.pop %v1151
    %v1153 = vmul.f32 %v1150, 1.442695
    %v1154 = vpow.pop %v1153
    %v1155 = vsel %vm157, %v1152, 0.0
    %1156 = vadd.xlane.f32.xlu0 %v1155
    %v1157 = vpop.xlane.xlu0 %1156
    %v1158 = vsel %vm157, %v1154, 0.0
    %1159 = vadd.xlane.f32.xlu0 %v1158
    %v1160 = vpop.xlane.xlu0 %1159
    %v1161 = vrcp.pop %v1157
    %v1162 = vrcp.pop %v1160
    %v1163 = vmul.f32 %v1152, %v1161
    %v1164 = vmul.f32 %v1154, %v1162
    %1165 = vrot.lane.b32.xlu0 %v135, 48
    %v1166 = vpop.permute.xlu0 %1165
    %v1169 = vsel %vm157, %v1163, 0
    %1171 = vmatprep.subr.mxu0 0.0
    %1172 = vmatpush1.msra.mxu0 0.0
    %1173 = vmatprep.subr.mxu0 0.0
    %1174 = vmatpush1.msra.mxu0 0.0
    %1175 = vmatprep.subr.mxu0 0.0
    %1176 = vmatpush1.msra.mxu0 0.0
    %1177 = vmatprep.subr.mxu0 0.0
    %1178 = vmatpush1.msra.mxu0 0.0
    %1179 = vmatprep.subr.mxu0 0.0
    %1180 = vmatpush1.msra.mxu0 0.0
    %1181 = vmatprep.subr.mxu0 0.0
    %1182 = vmatpush1.msra.mxu0 0.0
    %1183 = vmatprep.subr.mxu0 0.0
    %1184 = vmatpush1.msra.mxu0 0.0
    %1185 = vmatprep.subr.mxu0 0.0
    %1186 = vmatpush1.msra.mxu0 0.0
    %1187 = vmatprep.subr.mxu0 0.0
    %1188 = vmatpush1.msra.mxu0 0.0
    %1189 = vmatprep.subr.mxu0 0.0
    %1190 = vmatpush1.msra.mxu0 0.0
    %1191 = vmatprep.subr.mxu0 0.0
    %1192 = vmatpush1.msra.mxu0 0.0
    %1193 = vmatprep.subr.mxu0 0.0
    %1194 = vmatpush1.msra.mxu0 0.0
    %1195 = vmatprep.subr.mxu0 0.0
    %1196 = vmatpush1.msra.mxu0 0.0
    %1197 = vmatprep.subr.mxu0 0.0
    %1198 = vmatpush1.msra.mxu0 0.0
    %1199 = vmatprep.subr.mxu0 0.0
    %1200 = vmatpush1.msra.mxu0 0.0
    %1201 = vmatprep.subr.mxu0 0.0
    %1202 = vmatpush1.msra.mxu0 %v1166
    %1203 = vmatprep.subr.mxu0 0.0
    %1204 = vmatpush2.msra.mxu0 0.0
    %1205 = vmatprep.subr.mxu0 0.0
    %1206 = vmatpush2.msra.mxu0 0.0
    %1207 = vmatprep.subr.mxu0 0.0
    %1208 = vmatpush2.msra.mxu0 0.0
    %1209 = vmatprep.subr.mxu0 0.0
    %1210 = vmatpush2.msra.mxu0 0.0
    %1211 = vmatprep.subr.mxu0 0.0
    %1212 = vmatpush2.msra.mxu0 0.0
    %1213 = vmatprep.subr.mxu0 0.0
    %1214 = vmatpush2.msra.mxu0 0.0
    %1215 = vmatprep.subr.mxu0 0.0
    %1216 = vmatpush2.msra.mxu0 0.0
    %1217 = vmatprep.subr.mxu0 0.0
    %1218 = vmatpush2.msra.mxu0 0.0
    %1219 = vmatprep.subr.mxu0 0.0
    %1220 = vmatpush2.msra.mxu0 0.0
    %1221 = vmatprep.subr.mxu0 0.0
    %1222 = vmatpush2.msra.mxu0 0.0
    %1223 = vmatprep.subr.mxu0 0.0
    %1224 = vmatpush2.msra.mxu0 0.0
    %1225 = vmatprep.subr.mxu0 0.0
    %1226 = vmatpush2.msra.mxu0 0.0
    %1227 = vmatprep.subr.mxu0 0.0
    %1228 = vmatpush2.msra.mxu0 0.0
    %1229 = vmatprep.subr.mxu0 0.0
    %1230 = vmatpush2.msra.mxu0 0.0
    %1231 = vmatprep.subr.mxu0 0.0
    %1232 = vmatpush2.msra.mxu0 0.0
    %1233 = vmatprep.subr.mxu0 0.0
    %1234 = vmatpush2.msra.mxu0 0.0
    %1235 = vmatprep.mubr.f32.mxu0 0.0
    %1236 = vmatmul.mubr.f32.gmra.mxu0 %v1169
    %v1237 = vpop.f32.mrf.mxu0
    %v1238 = vadd.f32 0.0, %v1237
    %v1239 = vpop.f32.mrf.mxu0
    %1240 = vdwg.mxu0
    %1241 = vrot.lane.b32.xlu0 %v140, 48
    %v1242 = vpop.permute.xlu0 %1241
    %v1245 = vsel %vm157, %v1164, 0
    %1247 = vmatprep.subr.mxu0 0.0
    %1248 = vmatpush1.msra.mxu0 0.0
    %1249 = vmatprep.subr.mxu0 0.0
    %1250 = vmatpush1.msra.mxu0 0.0
    %1251 = vmatprep.subr.mxu0 0.0
    %1252 = vmatpush1.msra.mxu0 0.0
    %1253 = vmatprep.subr.mxu0 0.0
    %1254 = vmatpush1.msra.mxu0 0.0
    %1255 = vmatprep.subr.mxu0 0.0
    %1256 = vmatpush1.msra.mxu0 0.0
    %1257 = vmatprep.subr.mxu0 0.0
    %1258 = vmatpush1.msra.mxu0 0.0
    %1259 = vmatprep.subr.mxu0 0.0
    %1260 = vmatpush1.msra.mxu0 0.0
    %1261 = vmatprep.subr.mxu0 0.0
    %1262 = vmatpush1.msra.mxu0 0.0
    %1263 = vmatprep.subr.mxu0 0.0
    %1264 = vmatpush1.msra.mxu0 0.0
    %1265 = vmatprep.subr.mxu0 0.0
    %1266 = vmatpush1.msra.mxu0 0.0
    %1267 = vmatprep.subr.mxu0 0.0
    %1268 = vmatpush1.msra.mxu0 0.0
    %1269 = vmatprep.subr.mxu0 0.0
    %1270 = vmatpush1.msra.mxu0 0.0
    %1271 = vmatprep.subr.mxu0 0.0
    %1272 = vmatpush1.msra.mxu0 0.0
    %1273 = vmatprep.subr.mxu0 0.0
    %1274 = vmatpush1.msra.mxu0 0.0
    %1275 = vmatprep.subr.mxu0 0.0
    %1276 = vmatpush1.msra.mxu0 0.0
    %1277 = vmatprep.subr.mxu0 0.0
    %1278 = vmatpush1.msra.mxu0 %v1242
    %1279 = vmatprep.subr.mxu0 0.0
    %1280 = vmatpush2.msra.mxu0 0.0
    %1281 = vmatprep.subr.mxu0 0.0
    %1282 = vmatpush2.msra.mxu0 0.0
    %1283 = vmatprep.subr.mxu0 0.0
    %1284 = vmatpush2.msra.mxu0 0.0
    %1285 = vmatprep.subr.mxu0 0.0
    %1286 = vmatpush2.msra.mxu0 0.0
    %1287 = vmatprep.subr.mxu0 0.0
    %1288 = vmatpush2.msra.mxu0 0.0
    %1289 = vmatprep.subr.mxu0 0.0
    %1290 = vmatpush2.msra.mxu0 0.0
    %1291 = vmatprep.subr.mxu0 0.0
    %1292 = vmatpush2.msra.mxu0 0.0
    %1293 = vmatprep.subr.mxu0 0.0
    %1294 = vmatpush2.msra.mxu0 0.0
    %1295 = vmatprep.subr.mxu0 0.0
    %1296 = vmatpush2.msra.mxu0 0.0
    %1297 = vmatprep.subr.mxu0 0.0
    %1298 = vmatpush2.msra.mxu0 0.0
    %1299 = vmatprep.subr.mxu0 0.0
    %1300 = vmatpush2.msra.mxu0 0.0
    %1301 = vmatprep.subr.mxu0 0.0
    %1302 = vmatpush2.msra.mxu0 0.0
    %1303 = vmatprep.subr.mxu0 0.0
    %1304 = vmatpush2.msra.mxu0 0.0
    %1305 = vmatprep.subr.mxu0 0.0
    %1306 = vmatpush2.msra.mxu0 0.0
    %1307 = vmatprep.subr.mxu0 0.0
    %1308 = vmatpush2.msra.mxu0 0.0
    %1309 = vmatprep.subr.mxu0 0.0
    %1310 = vmatpush2.msra.mxu0 0.0
    %1311 = vmatprep.mubr.f32.mxu0 0.0
    %1312 = vmatmul.mubr.f32.gmra.mxu0 %v1245
    %v1313 = vpop.f32.mrf.mxu0
    %v1314 = vadd.f32 0.0, %v1313
    %v1315 = vpop.f32.mrf.mxu0
    %1316 = vdwg.mxu0
    %v1317 = vld [vmem:[%s4 + $0x10] sm:$0xff]
    %v1319 = vsel %vm157, %v1238, 0
    %v1322 = vsel %vm157, %v1314, 0
    %1324 = vmatprep.subr.mxu0 0.0
    %1325 = vmatpush1.msra.mxu0 0.0
    %1326 = vmatprep.subr.mxu0 0.0
    %1327 = vmatpush1.msra.mxu0 0.0
    %1328 = vmatprep.subr.mxu0 0.0
    %1329 = vmatpush1.msra.mxu0 0.0
    %1330 = vmatprep.subr.mxu0 0.0
    %1331 = vmatpush1.msra.mxu0 0.0
    %1332 = vmatprep.subr.mxu0 0.0
    %1333 = vmatpush1.msra.mxu0 0.0
    %1334 = vmatprep.subr.mxu0 0.0
    %1335 = vmatpush1.msra.mxu0 0.0
    %1336 = vmatprep.subr.mxu0 0.0
    %1337 = vmatpush1.msra.mxu0 0.0
    %1338 = vmatprep.subr.mxu0 0.0
    %1339 = vmatpush1.msra.mxu0 0.0
    %1340 = vmatprep.subr.mxu0 0.0
    %1341 = vmatpush1.msra.mxu0 0.0
    %1342 = vmatprep.subr.mxu0 0.0
    %1343 = vmatpush1.msra.mxu0 0.0
    %1344 = vmatprep.subr.mxu0 0.0
    %1345 = vmatpush1.msra.mxu0 0.0
    %1346 = vmatprep.subr.mxu0 0.0
    %1347 = vmatpush1.msra.mxu0 0.0
    %1348 = vmatprep.subr.mxu0 0.0
    %1349 = vmatpush1.msra.mxu0 0.0
    %1350 = vmatprep.subr.mxu0 0.0
    %1351 = vmatpush1.msra.mxu0 0.0
    %1352 = vmatprep.subr.mxu0 0.0
    %1353 = vmatpush1.msra.mxu0 0.0
    %1354 = vmatprep.subr.mxu0 0.0
    %1355 = vmatpush1.msra.mxu0 %v1317
    %1356 = vmatprep.subr.mxu0 0.0
    %1357 = vmatpush2.msra.mxu0 0.0
    %1358 = vmatprep.subr.mxu0 0.0
    %1359 = vmatpush2.msra.mxu0 0.0
    %1360 = vmatprep.subr.mxu0 0.0
    %1361 = vmatpush2.msra.mxu0 0.0
    %1362 = vmatprep.subr.mxu0 0.0
    %1363 = vmatpush2.msra.mxu0 0.0
    %1364 = vmatprep.subr.mxu0 0.0
    %1365 = vmatpush2.msra.mxu0 0.0
    %1366 = vmatprep.subr.mxu0 0.0
    %1367 = vmatpush2.msra.mxu0 0.0
    %1368 = vmatprep.subr.mxu0 0.0
    %1369 = vmatpush2.msra.mxu0 0.0
    %1370 = vmatprep.subr.mxu0 0.0
    %1371 = vmatpush2.msra.mxu0 0.0
    %1372 = vmatprep.subr.mxu0 0.0
    %1373 = vmatpush2.msra.mxu0 0.0
    %1374 = vmatprep.subr.mxu0 0.0
    %1375 = vmatpush2.msra.mxu0 0.0
    %1376 = vmatprep.subr.mxu0 0.0
    %1377 = vmatpush2.msra.mxu0 0.0
    %1378 = vmatprep.subr.mxu0 0.0
    %1379 = vmatpush2.msra.mxu0 0.0
    %1380 = vmatprep.subr.mxu0 0.0
    %1381 = vmatpush2.msra.mxu0 0.0
    %1382 = vmatprep.subr.mxu0 0.0
    %1383 = vmatpush2.msra.mxu0 0.0
    %1384 = vmatprep.subr.mxu0 0.0
    %1385 = vmatpush2.msra.mxu0 0.0
    %1386 = vmatprep.subr.mxu0 0.0
    %1387 = vmatpush2.msra.mxu0 0.0
    %1388 = vmatprep.mubr.f32.mxu0 0.0
    %1389 = vmatmul.mubr.f32.gmra.mxu0 %v1319
    %v1390 = vpop.f32.mrf.mxu0
    %v1391 = vadd.f32 0.0, %v1390
    %v1392 = vpop.f32.mrf.mxu0
    %1393 = vmatprep.mubr.f32.mxu0 0.0
    %1394 = vmatmul.mubr.f32.gmra.mxu0 %v1322
    %v1395 = vpop.f32.mrf.mxu0
    %v1396 = vadd.f32 0.0, %v1395
    %v1397 = vpop.f32.mrf.mxu0
    %1398 = vdwg.mxu0
    %v1399 = vadd.f32 %v983, %v1391
    %v1400 = vadd.f32 %v984, %v1396
    %1401 = vrot.lane.b32.xlu0 %v135, 104
    %v1402 = vpop.permute.xlu0 %1401
    %1403 = vrot.lane.b32.xlu0 %v135, 72
    %v1404 = vpop.permute.xlu0 %1403
    %v1405 = vsel %vm157, %v1402, 0
    %v1407 = vsel %vm157, %v1404, 0
    %1409 = vmatprep.subr.mxu0 0.0
    %1410 = vmatpush1.xpose.msra.mxu0 0.0
    %1411 = vmatprep.subr.mxu0 0.0
    %1412 = vmatpush1.xpose.msra.mxu0 0.0
    %1413 = vmatprep.subr.mxu0 0.0
    %1414 = vmatpush1.xpose.msra.mxu0 0.0
    %1415 = vmatprep.subr.mxu0 0.0
    %1416 = vmatpush1.xpose.msra.mxu0 0.0
    %1417 = vmatprep.subr.mxu0 0.0
    %1418 = vmatpush1.xpose.msra.mxu0 0.0
    %1419 = vmatprep.subr.mxu0 0.0
    %1420 = vmatpush1.xpose.msra.mxu0 0.0
    %1421 = vmatprep.subr.mxu0 0.0
    %1422 = vmatpush1.xpose.msra.mxu0 0.0
    %1423 = vmatprep.subr.mxu0 0.0
    %1424 = vmatpush1.xpose.msra.mxu0 0.0
    %1425 = vmatprep.subr.mxu0 0.0
    %1426 = vmatpush1.xpose.msra.mxu0 0.0
    %1427 = vmatprep.subr.mxu0 0.0
    %1428 = vmatpush1.xpose.msra.mxu0 0.0
    %1429 = vmatprep.subr.mxu0 0.0
    %1430 = vmatpush1.xpose.msra.mxu0 0.0
    %1431 = vmatprep.subr.mxu0 0.0
    %1432 = vmatpush1.xpose.msra.mxu0 0.0
    %1433 = vmatprep.subr.mxu0 0.0
    %1434 = vmatpush1.xpose.msra.mxu0 0.0
    %1435 = vmatprep.subr.mxu0 0.0
    %1436 = vmatpush1.xpose.msra.mxu0 0.0
    %1437 = vmatprep.subr.mxu0 0.0
    %1438 = vmatpush1.xpose.msra.mxu0 0.0
    %1439 = vmatprep.subr.mxu0 0.0
    %1440 = vmatpush1.xpose.msra.mxu0 %v1407
    %1441 = vmatprep.subr.mxu0 0.0
    %1442 = vmatpush2.xpose.msra.mxu0 0.0
    %1443 = vmatprep.subr.mxu0 0.0
    %1444 = vmatpush2.xpose.msra.mxu0 0.0
    %1445 = vmatprep.subr.mxu0 0.0
    %1446 = vmatpush2.xpose.msra.mxu0 0.0
    %1447 = vmatprep.subr.mxu0 0.0
    %1448 = vmatpush2.xpose.msra.mxu0 0.0
    %1449 = vmatprep.subr.mxu0 0.0
    %1450 = vmatpush2.xpose.msra.mxu0 0.0
    %1451 = vmatprep.subr.mxu0 0.0
    %1452 = vmatpush2.xpose.msra.mxu0 0.0
    %1453 = vmatprep.subr.mxu0 0.0
    %1454 = vmatpush2.xpose.msra.mxu0 0.0
    %1455 = vmatprep.subr.mxu0 0.0
    %1456 = vmatpush2.xpose.msra.mxu0 0.0
    %1457 = vmatprep.subr.mxu0 0.0
    %1458 = vmatpush2.xpose.msra.mxu0 0.0
    %1459 = vmatprep.subr.mxu0 0.0
    %1460 = vmatpush2.xpose.msra.mxu0 0.0
    %1461 = vmatprep.subr.mxu0 0.0
    %1462 = vmatpush2.xpose.msra.mxu0 0.0
    %1463 = vmatprep.subr.mxu0 0.0
    %1464 = vmatpush2.xpose.msra.mxu0 0.0
    %1465 = vmatprep.subr.mxu0 0.0
    %1466 = vmatpush2.xpose.msra.mxu0 0.0
    %1467 = vmatprep.subr.mxu0 0.0
    %1468 = vmatpush2.xpose.msra.mxu0 0.0
    %1469 = vmatprep.subr.mxu0 0.0
    %1470 = vmatpush2.xpose.msra.mxu0 0.0
    %1471 = vmatprep.subr.mxu0 0.0
    %1472 = vmatpush2.xpose.msra.mxu0 0.0
    %1473 = vmatprep.mubr.f32.mxu0 0.0
    %1474 = vmatmul.mubr.f32.gmra.mxu0 %v1405
    %v1475 = vpop.f32.mrf.mxu0
    %v1476 = vadd.f32 0.0, %v1475
    %v1477 = vpop.f32.mrf.mxu0
    %1478 = vdwg.mxu0
    %1479 = vrot.lane.b32.xlu0 %v140, 104
    %v1480 = vpop.permute.xlu0 %1479
    %1481 = vrot.lane.b32.xlu0 %v140, 72
    %v1482 = vpop.permute.xlu0 %1481
    %v1483 = vsel %vm157, %v1480, 0
    %v1485 = vsel %vm157, %v1482, 0
    %1487 = vmatprep.subr.mxu0 0.0
    %1488 = vmatpush1.xpose.msra.mxu0 0.0
    %1489 = vmatprep.subr.mxu0 0.0
    %1490 = vmatpush1.xpose.msra.mxu0 0.0
    %1491 = vmatprep.subr.mxu0 0.0
    %1492 = vmatpush1.xpose.msra.mxu0 0.0
    %1493 = vmatprep.subr.mxu0 0.0
    %1494 = vmatpush1.xpose.msra.mxu0 0.0
    %1495 = vmatprep.subr.mxu0 0.0
    %1496 = vmatpush1.xpose.msra.mxu0 0.0
    %1497 = vmatprep.subr.mxu0 0.0
    %1498 = vmatpush1.xpose.msra.mxu0 0.0
    %1499 = vmatprep.subr.mxu0 0.0
    %1500 = vmatpush1.xpose.msra.mxu0 0.0
    %1501 = vmatprep.subr.mxu0 0.0
    %1502 = vmatpush1.xpose.msra.mxu0 0.0
    %1503 = vmatprep.subr.mxu0 0.0
    %1504 = vmatpush1.xpose.msra.mxu0 0.0
    %1505 = vmatprep.subr.mxu0 0.0
    %1506 = vmatpush1.xpose.msra.mxu0 0.0
    %1507 = vmatprep.subr.mxu0 0.0
    %1508 = vmatpush1.xpose.msra.mxu0 0.0
    %1509 = vmatprep.subr.mxu0 0.0
    %1510 = vmatpush1.xpose.msra.mxu0 0.0
    %1511 = vmatprep.subr.mxu0 0.0
    %1512 = vmatpush1.xpose.msra.mxu0 0.0
    %1513 = vmatprep.subr.mxu0 0.0
    %1514 = vmatpush1.xpose.msra.mxu0 0.0
    %1515 = vmatprep.subr.mxu0 0.0
    %1516 = vmatpush1.xpose.msra.mxu0 0.0
    %1517 = vmatprep.subr.mxu0 0.0
    %1518 = vmatpush1.xpose.msra.mxu0 %v1485
    %1519 = vmatprep.subr.mxu0 0.0
    %1520 = vmatpush2.xpose.msra.mxu0 0.0
    %1521 = vmatprep.subr.mxu0 0.0
    %1522 = vmatpush2.xpose.msra.mxu0 0.0
    %1523 = vmatprep.subr.mxu0 0.0
    %1524 = vmatpush2.xpose.msra.mxu0 0.0
    %1525 = vmatprep.subr.mxu0 0.0
    %1526 = vmatpush2.xpose.msra.mxu0 0.0
    %1527 = vmatprep.subr.mxu0 0.0
    %1528 = vmatpush2.xpose.msra.mxu0 0.0
    %1529 = vmatprep.subr.mxu0 0.0
    %1530 = vmatpush2.xpose.msra.mxu0 0.0
    %1531 = vmatprep.subr.mxu0 0.0
    %1532 = vmatpush2.xpose.msra.mxu0 0.0
    %1533 = vmatprep.subr.mxu0 0.0
    %1534 = vmatpush2.xpose.msra.mxu0 0.0
    %1535 = vmatprep.subr.mxu0 0.0
    %1536 = vmatpush2.xpose.msra.mxu0 0.0
    %1537 = vmatprep.subr.mxu0 0.0
    %1538 = vmatpush2.xpose.msra.mxu0 0.0
    %1539 = vmatprep.subr.mxu0 0.0
    %1540 = vmatpush2.xpose.msra.mxu0 0.0
    %1541 = vmatprep.subr.mxu0 0.0
    %1542 = vmatpush2.xpose.msra.mxu0 0.0
    %1543 = vmatprep.subr.mxu0 0.0
    %1544 = vmatpush2.xpose.msra.mxu0 0.0
    %1545 = vmatprep.subr.mxu0 0.0
    %1546 = vmatpush2.xpose.msra.mxu0 0.0
    %1547 = vmatprep.subr.mxu0 0.0
    %1548 = vmatpush2.xpose.msra.mxu0 0.0
    %1549 = vmatprep.subr.mxu0 0.0
    %1550 = vmatpush2.xpose.msra.mxu0 0.0
    %1551 = vmatprep.mubr.f32.mxu0 0.0
    %1552 = vmatmul.mubr.f32.gmra.mxu0 %v1483
    %v1553 = vpop.f32.mrf.mxu0
    %v1554 = vadd.f32 0.0, %v1553
    %v1555 = vpop.f32.mrf.mxu0
    %1556 = vdwg.mxu0
    %v1557 = vmin.f32 %v1476, %v143
    %v1558 = vmin.f32 %v1554, %v144
    %v1559 = vsel %vm157, %v1557, -inf
    %1560 = vmax.xlane.f32.xlu0 %v1559
    %v1561 = vpop.xlane.xlu0 %1560
    %v1562 = vsel %vm157, %v1558, -inf
    %1563 = vmax.xlane.f32.xlu0 %v1562
    %v1564 = vpop.xlane.xlu0 %1563
    %v1565 = vsub.f32 %v1557, %v1561
    %v1566 = vsub.f32 %v1558, %v1564
    %v1567 = vmul.f32 %v1565, 1.442695
    %v1568 = vpow.pop %v1567
    %v1569 = vmul.f32 %v1566, 1.442695
    %v1570 = vpow.pop %v1569
    %v1571 = vsel %vm157, %v1568, 0.0
    %1572 = vadd.xlane.f32.xlu0 %v1571
    %v1573 = vpop.xlane.xlu0 %1572
    %v1574 = vsel %vm157, %v1570, 0.0
    %1575 = vadd.xlane.f32.xlu0 %v1574
    %v1576 = vpop.xlane.xlu0 %1575
    %v1577 = vrcp.pop %v1573
    %v1578 = vrcp.pop %v1576
    %v1579 = vmul.f32 %v1568, %v1577
    %v1580 = vmul.f32 %v1570, %v1578
    %1581 = vrot.lane.b32.xlu0 %v135, 40
    %v1582 = vpop.permute.xlu0 %1581
    %v1585 = vsel %vm157, %v1579, 0
    %1587 = vmatprep.subr.mxu0 0.0
    %1588 = vmatpush1.msra.mxu0 0.0
    %1589 = vmatprep.subr.mxu0 0.0
    %1590 = vmatpush1.msra.mxu0 0.0
    %1591 = vmatprep.subr.mxu0 0.0
    %1592 = vmatpush1.msra.mxu0 0.0
    %1593 = vmatprep.subr.mxu0 0.0
    %1594 = vmatpush1.msra.mxu0 0.0
    %1595 = vmatprep.subr.mxu0 0.0
    %1596 = vmatpush1.msra.mxu0 0.0
    %1597 = vmatprep.subr.mxu0 0.0
    %1598 = vmatpush1.msra.mxu0 0.0
    %1599 = vmatprep.subr.mxu0 0.0
    %1600 = vmatpush1.msra.mxu0 0.0
    %1601 = vmatprep.subr.mxu0 0.0
    %1602 = vmatpush1.msra.mxu0 0.0
    %1603 = vmatprep.subr.mxu0 0.0
    %1604 = vmatpush1.msra.mxu0 0.0
    %1605 = vmatprep.subr.mxu0 0.0
    %1606 = vmatpush1.msra.mxu0 0.0
    %1607 = vmatprep.subr.mxu0 0.0
    %1608 = vmatpush1.msra.mxu0 0.0
    %1609 = vmatprep.subr.mxu0 0.0
    %1610 = vmatpush1.msra.mxu0 0.0
    %1611 = vmatprep.subr.mxu0 0.0
    %1612 = vmatpush1.msra.mxu0 0.0
    %1613 = vmatprep.subr.mxu0 0.0
    %1614 = vmatpush1.msra.mxu0 0.0
    %1615 = vmatprep.subr.mxu0 0.0
    %1616 = vmatpush1.msra.mxu0 0.0
    %1617 = vmatprep.subr.mxu0 0.0
    %1618 = vmatpush1.msra.mxu0 %v1582
    %1619 = vmatprep.subr.mxu0 0.0
    %1620 = vmatpush2.msra.mxu0 0.0
    %1621 = vmatprep.subr.mxu0 0.0
    %1622 = vmatpush2.msra.mxu0 0.0
    %1623 = vmatprep.subr.mxu0 0.0
    %1624 = vmatpush2.msra.mxu0 0.0
    %1625 = vmatprep.subr.mxu0 0.0
    %1626 = vmatpush2.msra.mxu0 0.0
    %1627 = vmatprep.subr.mxu0 0.0
    %1628 = vmatpush2.msra.mxu0 0.0
    %1629 = vmatprep.subr.mxu0 0.0
    %1630 = vmatpush2.msra.mxu0 0.0
    %1631 = vmatprep.subr.mxu0 0.0
    %1632 = vmatpush2.msra.mxu0 0.0
    %1633 = vmatprep.subr.mxu0 0.0
    %1634 = vmatpush2.msra.mxu0 0.0
    %1635 = vmatprep.subr.mxu0 0.0
    %1636 = vmatpush2.msra.mxu0 0.0
    %1637 = vmatprep.subr.mxu0 0.0
    %1638 = vmatpush2.msra.mxu0 0.0
    %1639 = vmatprep.subr.mxu0 0.0
    %1640 = vmatpush2.msra.mxu0 0.0
    %1641 = vmatprep.subr.mxu0 0.0
    %1642 = vmatpush2.msra.mxu0 0.0
    %1643 = vmatprep.subr.mxu0 0.0
    %1644 = vmatpush2.msra.mxu0 0.0
    %1645 = vmatprep.subr.mxu0 0.0
    %1646 = vmatpush2.msra.mxu0 0.0
    %1647 = vmatprep.subr.mxu0 0.0
    %1648 = vmatpush2.msra.mxu0 0.0
    %1649 = vmatprep.subr.mxu0 0.0
    %1650 = vmatpush2.msra.mxu0 0.0
    %1651 = vmatprep.mubr.f32.mxu0 0.0
    %1652 = vmatmul.mubr.f32.gmra.mxu0 %v1585
    %v1653 = vpop.f32.mrf.mxu0
    %v1654 = vadd.f32 0.0, %v1653
    %v1655 = vpop.f32.mrf.mxu0
    %1656 = vdwg.mxu0
    %1657 = vrot.lane.b32.xlu0 %v140, 40
    %v1658 = vpop.permute.xlu0 %1657
    %v1661 = vsel %vm157, %v1580, 0
    %1663 = vmatprep.subr.mxu0 0.0
    %1664 = vmatpush1.msra.mxu0 0.0
    %1665 = vmatprep.subr.mxu0 0.0
    %1666 = vmatpush1.msra.mxu0 0.0
    %1667 = vmatprep.subr.mxu0 0.0
    %1668 = vmatpush1.msra.mxu0 0.0
    %1669 = vmatprep.subr.mxu0 0.0
    %1670 = vmatpush1.msra.mxu0 0.0
    %1671 = vmatprep.subr.mxu0 0.0
    %1672 = vmatpush1.msra.mxu0 0.0
    %1673 = vmatprep.subr.mxu0 0.0
    %1674 = vmatpush1.msra.mxu0 0.0
    %1675 = vmatprep.subr.mxu0 0.0
    %1676 = vmatpush1.msra.mxu0 0.0
    %1677 = vmatprep.subr.mxu0 0.0
    %1678 = vmatpush1.msra.mxu0 0.0
    %1679 = vmatprep.subr.mxu0 0.0
    %1680 = vmatpush1.msra.mxu0 0.0
    %1681 = vmatprep.subr.mxu0 0.0
    %1682 = vmatpush1.msra.mxu0 0.0
    %1683 = vmatprep.subr.mxu0 0.0
    %1684 = vmatpush1.msra.mxu0 0.0
    %1685 = vmatprep.subr.mxu0 0.0
    %1686 = vmatpush1.msra.mxu0 0.0
    %1687 = vmatprep.subr.mxu0 0.0
    %1688 = vmatpush1.msra.mxu0 0.0
    %1689 = vmatprep.subr.mxu0 0.0
    %1690 = vmatpush1.msra.mxu0 0.0
    %1691 = vmatprep.subr.mxu0 0.0
    %1692 = vmatpush1.msra.mxu0 0.0
    %1693 = vmatprep.subr.mxu0 0.0
    %1694 = vmatpush1.msra.mxu0 %v1658
    %1695 = vmatprep.subr.mxu0 0.0
    %1696 = vmatpush2.msra.mxu0 0.0
    %1697 = vmatprep.subr.mxu0 0.0
    %1698 = vmatpush2.msra.mxu0 0.0
    %1699 = vmatprep.subr.mxu0 0.0
    %1700 = vmatpush2.msra.mxu0 0.0
    %1701 = vmatprep.subr.mxu0 0.0
    %1702 = vmatpush2.msra.mxu0 0.0
    %1703 = vmatprep.subr.mxu0 0.0
    %1704 = vmatpush2.msra.mxu0 0.0
    %1705 = vmatprep.subr.mxu0 0.0
    %1706 = vmatpush2.msra.mxu0 0.0
    %1707 = vmatprep.subr.mxu0 0.0
    %1708 = vmatpush2.msra.mxu0 0.0
    %1709 = vmatprep.subr.mxu0 0.0
    %1710 = vmatpush2.msra.mxu0 0.0
    %1711 = vmatprep.subr.mxu0 0.0
    %1712 = vmatpush2.msra.mxu0 0.0
    %1713 = vmatprep.subr.mxu0 0.0
    %1714 = vmatpush2.msra.mxu0 0.0
    %1715 = vmatprep.subr.mxu0 0.0
    %1716 = vmatpush2.msra.mxu0 0.0
    %1717 = vmatprep.subr.mxu0 0.0
    %1718 = vmatpush2.msra.mxu0 0.0
    %1719 = vmatprep.subr.mxu0 0.0
    %1720 = vmatpush2.msra.mxu0 0.0
    %1721 = vmatprep.subr.mxu0 0.0
    %1722 = vmatpush2.msra.mxu0 0.0
    %1723 = vmatprep.subr.mxu0 0.0
    %1724 = vmatpush2.msra.mxu0 0.0
    %1725 = vmatprep.subr.mxu0 0.0
    %1726 = vmatpush2.msra.mxu0 0.0
    %1727 = vmatprep.mubr.f32.mxu0 0.0
    %1728 = vmatmul.mubr.f32.gmra.mxu0 %v1661
    %v1729 = vpop.f32.mrf.mxu0
    %v1730 = vadd.f32 0.0, %v1729
    %v1731 = vpop.f32.mrf.mxu0
    %1732 = vdwg.mxu0
    %v1733 = vld [vmem:[%s4 + $0x18] sm:$0xff]
    %v1735 = vsel %vm157, %v1654, 0
    %v1738 = vsel %vm157, %v1730, 0
    %1740 = vmatprep.subr.mxu0 0.0
    %1741 = vmatpush1.msra.mxu0 0.0
    %1742 = vmatprep.subr.mxu0 0.0
    %1743 = vmatpush1.msra.mxu0 0.0
    %1744 = vmatprep.subr.mxu0 0.0
    %1745 = vmatpush1.msra.mxu0 0.0
    %1746 = vmatprep.subr.mxu0 0.0
    %1747 = vmatpush1.msra.mxu0 0.0
    %1748 = vmatprep.subr.mxu0 0.0
    %1749 = vmatpush1.msra.mxu0 0.0
    %1750 = vmatprep.subr.mxu0 0.0
    %1751 = vmatpush1.msra.mxu0 0.0
    %1752 = vmatprep.subr.mxu0 0.0
    %1753 = vmatpush1.msra.mxu0 0.0
    %1754 = vmatprep.subr.mxu0 0.0
    %1755 = vmatpush1.msra.mxu0 0.0
    %1756 = vmatprep.subr.mxu0 0.0
    %1757 = vmatpush1.msra.mxu0 0.0
    %1758 = vmatprep.subr.mxu0 0.0
    %1759 = vmatpush1.msra.mxu0 0.0
    %1760 = vmatprep.subr.mxu0 0.0
    %1761 = vmatpush1.msra.mxu0 0.0
    %1762 = vmatprep.subr.mxu0 0.0
    %1763 = vmatpush1.msra.mxu0 0.0
    %1764 = vmatprep.subr.mxu0 0.0
    %1765 = vmatpush1.msra.mxu0 0.0
    %1766 = vmatprep.subr.mxu0 0.0
    %1767 = vmatpush1.msra.mxu0 0.0
    %1768 = vmatprep.subr.mxu0 0.0
    %1769 = vmatpush1.msra.mxu0 0.0
    %1770 = vmatprep.subr.mxu0 0.0
    %1771 = vmatpush1.msra.mxu0 %v1733
    %1772 = vmatprep.subr.mxu0 0.0
    %1773 = vmatpush2.msra.mxu0 0.0
    %1774 = vmatprep.subr.mxu0 0.0
    %1775 = vmatpush2.msra.mxu0 0.0
    %1776 = vmatprep.subr.mxu0 0.0
    %1777 = vmatpush2.msra.mxu0 0.0
    %1778 = vmatprep.subr.mxu0 0.0
    %1779 = vmatpush2.msra.mxu0 0.0
    %1780 = vmatprep.subr.mxu0 0.0
    %1781 = vmatpush2.msra.mxu0 0.0
    %1782 = vmatprep.subr.mxu0 0.0
    %1783 = vmatpush2.msra.mxu0 0.0
    %1784 = vmatprep.subr.mxu0 0.0
    %1785 = vmatpush2.msra.mxu0 0.0
    %1786 = vmatprep.subr.mxu0 0.0
    %1787 = vmatpush2.msra.mxu0 0.0
    %1788 = vmatprep.subr.mxu0 0.0
    %1789 = vmatpush2.msra.mxu0 0.0
    %1790 = vmatprep.subr.mxu0 0.0
    %1791 = vmatpush2.msra.mxu0 0.0
    %1792 = vmatprep.subr.mxu0 0.0
    %1793 = vmatpush2.msra.mxu0 0.0
    %1794 = vmatprep.subr.mxu0 0.0
    %1795 = vmatpush2.msra.mxu0 0.0
    %1796 = vmatprep.subr.mxu0 0.0
    %1797 = vmatpush2.msra.mxu0 0.0
    %1798 = vmatprep.subr.mxu0 0.0
    %1799 = vmatpush2.msra.mxu0 0.0
    %1800 = vmatprep.subr.mxu0 0.0
    %1801 = vmatpush2.msra.mxu0 0.0
    %1802 = vmatprep.subr.mxu0 0.0
    %1803 = vmatpush2.msra.mxu0 0.0
    %1804 = vmatprep.mubr.f32.mxu0 0.0
    %1805 = vmatmul.mubr.f32.gmra.mxu0 %v1735
    %v1806 = vpop.f32.mrf.mxu0
    %v1807 = vadd.f32 0.0, %v1806
    %v1808 = vpop.f32.mrf.mxu0
    %1809 = vmatprep.mubr.f32.mxu0 0.0
    %1810 = vmatmul.mubr.f32.gmra.mxu0 %v1738
    %v1811 = vpop.f32.mrf.mxu0
    %v1812 = vadd.f32 0.0, %v1811
    %v1813 = vpop.f32.mrf.mxu0
    %1814 = vdwg.mxu0
    %v1815 = vadd.f32 %v1399, %v1807
    %v1816 = vadd.f32 %v1400, %v1812
    %v1817 = vld [vmem:[%s6] sm:$0x1]
    %v1818 = vld [vmem:[%s7] sm:$0x1]
    %v1819 = vsel %vm61, %v1815, 0.0
    %1820 = vadd.xlane.f32.xlu0 %v1819
    %v1821 = vpop.xlane.xlu0 %1820
    %v1822 = vsel %vm61, %v1816, 0.0
    %1823 = vadd.xlane.f32.xlu0 %v1822
    %v1824 = vpop.xlane.xlu0 %1823
    %v1825 = vrcp.pop 32.0
    %v1826 = vmul.f32 %v1821, %v1825
    %v1827 = vmul.f32 %v1824, %v1825
    %v1828 = vsub.f32 %v1815, %v1826
    %v1829 = vsub.f32 %v1816, %v1827
    %v1830 = vmul.f32 %v1828, %v1828
    %v1831 = vmul.f32 %v1829, %v1829
    %v1832 = vsel %vm61, %v1830, 0.0
    %1833 = vadd.xlane.f32.xlu0 %v1832
    %v1834 = vpop.xlane.xlu0 %1833
    %v1835 = vsel %vm61, %v1831, 0.0
    %1836 = vadd.xlane.f32.xlu0 %v1835
    %v1837 = vpop.xlane.xlu0 %1836
    %v1838 = vmul.f32 %v1834, %v1825
    %v1839 = vmul.f32 %v1837, %v1825
    %v1840 = vadd.f32 %v1838, 1e-05
    %v1841 = vadd.f32 %v1839, 1e-05
    %v1842 = vrsqrt.pop %v1840
    %v1843 = vrsqrt.pop %v1841
    %v1844 = vmul.f32 %v1828, %v1842
    %v1845 = vmul.f32 %v1829, %v1843
    %v1847 = vlaneseq
    %v1848 = vshrl.u32 %v1847, 7
    %v1849 = vsub.s32 0, %v1848
    %v1850 = vrot.slane %v1817, %v1849
    %v1852 = vmul.f32 %v1844, %v1850
    %v1853 = vmul.f32 %v1845, %v1850
    %v1855 = vlaneseq
    %v1856 = vshrl.u32 %v1855, 7
    %v1857 = vsub.s32 0, %v1856
    %v1858 = vrot.slane %v1818, %v1857
    %v1860 = vadd.f32 %v1852, %v1858
    %v1861 = vadd.f32 %v1853, %v1858
    %v1862 = vld [vmem:[%s8] sm:$0xff]
    %v1863 = vld [vmem:[%s8 + $0x8] sm:$0xff]
    %v1864 = vld [vmem:[%s8 + $0x10] sm:$0xff]
    %v1865 = vld [vmem:[%s8 + $0x18] sm:$0xff]
    %v1866 = vld [vmem:[%s9] sm:$0x1]
    %v1868 = vlaneseq
    %v1869 = vshrl.u32 %v1868, 7
    %v1870 = vsub.s32 0, %v1869
    %v1871 = vrot.slane %v1866, %v1870
    %v1874 = vsel %vm61, %v1860, 0
    %v1877 = vsel %vm61, %v1861, 0
    %1879 = vmatprep.subr.mxu0 0.0
    %1880 = vmatpush1.msra.mxu0 0.0
    %1881 = vmatprep.subr.mxu0 0.0
    %1882 = vmatpush1.msra.mxu0 0.0
    %1883 = vmatprep.subr.mxu0 0.0
    %1884 = vmatpush1.msra.mxu0 0.0
    %1885 = vmatprep.subr.mxu0 0.0
    %1886 = vmatpush1.msra.mxu0 0.0
    %1887 = vmatprep.subr.mxu0 0.0
    %1888 = vmatpush1.msra.mxu0 0.0
    %1889 = vmatprep.subr.mxu0 0.0
    %1890 = vmatpush1.msra.mxu0 0.0
    %1891 = vmatprep.subr.mxu0 0.0
    %1892 = vmatpush1.msra.mxu0 0.0
    %1893 = vmatprep.subr.mxu0 0.0
    %1894 = vmatpush1.msra.mxu0 0.0
    %1895 = vmatprep.subr.mxu0 0.0
    %1896 = vmatpush1.msra.mxu0 0.0
    %1897 = vmatprep.subr.mxu0 0.0
    %1898 = vmatpush1.msra.mxu0 0.0
    %1899 = vmatprep.subr.mxu0 0.0
    %1900 = vmatpush1.msra.mxu0 0.0
    %1901 = vmatprep.subr.mxu0 0.0
    %1902 = vmatpush1.msra.mxu0 0.0
    %1903 = vmatprep.subr.mxu0 0.0
    %1904 = vmatpush1.msra.mxu0 %v1865
    %1905 = vmatprep.subr.mxu0 0.0
    %1906 = vmatpush1.msra.mxu0 %v1864
    %1907 = vmatprep.subr.mxu0 0.0
    %1908 = vmatpush1.msra.mxu0 %v1863
    %1909 = vmatprep.subr.mxu0 0.0
    %1910 = vmatpush1.msra.mxu0 %v1862
    %1911 = vmatprep.subr.mxu0 0.0
    %1912 = vmatpush2.msra.mxu0 0.0
    %1913 = vmatprep.subr.mxu0 0.0
    %1914 = vmatpush2.msra.mxu0 0.0
    %1915 = vmatprep.subr.mxu0 0.0
    %1916 = vmatpush2.msra.mxu0 0.0
    %1917 = vmatprep.subr.mxu0 0.0
    %1918 = vmatpush2.msra.mxu0 0.0
    %1919 = vmatprep.subr.mxu0 0.0
    %1920 = vmatpush2.msra.mxu0 0.0
    %1921 = vmatprep.subr.mxu0 0.0
    %1922 = vmatpush2.msra.mxu0 0.0
    %1923 = vmatprep.subr.mxu0 0.0
    %1924 = vmatpush2.msra.mxu0 0.0
    %1925 = vmatprep.subr.mxu0 0.0
    %1926 = vmatpush2.msra.mxu0 0.0
    %1927 = vmatprep.subr.mxu0 0.0
    %1928 = vmatpush2.msra.mxu0 0.0
    %1929 = vmatprep.subr.mxu0 0.0
    %1930 = vmatpush2.msra.mxu0 0.0
    %1931 = vmatprep.subr.mxu0 0.0
    %1932 = vmatpush2.msra.mxu0 0.0
    %1933 = vmatprep.subr.mxu0 0.0
    %1934 = vmatpush2.msra.mxu0 0.0
    %1935 = vmatprep.subr.mxu0 0.0
    %1936 = vmatpush2.msra.mxu0 0.0
    %1937 = vmatprep.subr.mxu0 0.0
    %1938 = vmatpush2.msra.mxu0 0.0
    %1939 = vmatprep.subr.mxu0 0.0
    %1940 = vmatpush2.msra.mxu0 0.0
    %1941 = vmatprep.subr.mxu0 0.0
    %1942 = vmatpush2.msra.mxu0 0.0
    %1943 = vmatprep.mubr.f32.mxu0 0.0
    %1944 = vmatmul.mubr.f32.gmra.mxu0 %v1874
    %v1945 = vpop.f32.mrf.mxu0
    %v1946 = vadd.f32 %v1871, %v1945
    %v1947 = vpop.f32.mrf.mxu0
    %1948 = vmatprep.mubr.f32.mxu0 0.0
    %1949 = vmatmul.mubr.f32.gmra.mxu0 %v1877
    %v1950 = vpop.f32.mrf.mxu0
    %v1951 = vadd.f32 %v1871, %v1950
    %v1952 = vpop.f32.mrf.mxu0
    %1953 = vdwg.mxu0
    %v1954 = vmul.f32 %v1946, 0.5
    %v1955 = vmul.f32 %v1951, 0.5
    %v1956 = vmul.f32 %v1946, 0.044715
    %v1957 = vmul.f32 %v1951, 0.044715
    %v1958 = vmul.f32 %v1956, %v1946
    %v1959 = vmul.f32 %v1957, %v1951
    %v1960 = vmul.f32 %v1958, %v1946
    %v1961 = vmul.f32 %v1959, %v1951
    %v1962 = vadd.f32 %v1946, %v1960
    %v1963 = vadd.f32 %v1951, %v1961
    %v1964 = vmul.f32 %v1962, 0.7978846
    %v1965 = vmul.f32 %v1963, 0.7978846
    %v1966 = vtanh.pop %v1964
    %v1967 = vtanh.pop %v1965
    %v1968 = vadd.f32 %v1966, 1.0
    %v1969 = vadd.f32 %v1967, 1.0
    %v1970 = vmul.f32 %v1954, %v1968
    %v1971 = vmul.f32 %v1955, %v1969
    %v1972 = vld [vmem:[%s10] sm:$0xff]
    %v1973 = vld [vmem:[%s10 + $0x8] sm:$0xff]
    %v1974 = vld [vmem:[%s10 + $0x10] sm:$0xff]
    %v1975 = vld [vmem:[%s10 + $0x18] sm:$0xff]
    %v1976 = vld [vmem:[%s10 + $0x20] sm:$0xff]
    %v1977 = vld [vmem:[%s10 + $0x28] sm:$0xff]
    %v1978 = vld [vmem:[%s10 + $0x30] sm:$0xff]
    %v1979 = vld [vmem:[%s10 + $0x38] sm:$0xff]
    %v1980 = vld [vmem:[%s11] sm:$0x1]
    %v1982 = vlaneseq
    %v1983 = vshrl.u32 %v1982, 7
    %v1984 = vsub.s32 0, %v1983
    %v1985 = vrot.slane %v1980, %v1984
    %vm1987 = vcmask 523264
    %v1989 = vsel %vm1987, %v1970, 0
    %v1992 = vsel %vm1987, %v1971, 0
    %1994 = vmatprep.subr.mxu0 0.0
    %1995 = vmatpush1.msra.mxu0 0.0
    %1996 = vmatprep.subr.mxu0 0.0
    %1997 = vmatpush1.msra.mxu0 0.0
    %1998 = vmatprep.subr.mxu0 0.0
    %1999 = vmatpush1.msra.mxu0 0.0
    %2000 = vmatprep.subr.mxu0 0.0
    %2001 = vmatpush1.msra.mxu0 0.0
    %2002 = vmatprep.subr.mxu0 0.0
    %2003 = vmatpush1.msra.mxu0 0.0
    %2004 = vmatprep.subr.mxu0 0.0
    %2005 = vmatpush1.msra.mxu0 0.0
    %2006 = vmatprep.subr.mxu0 0.0
    %2007 = vmatpush1.msra.mxu0 0.0
    %2008 = vmatprep.subr.mxu0 0.0
    %2009 = vmatpush1.msra.mxu0 0.0
    %2010 = vmatprep.subr.mxu0 0.0
    %2011 = vmatpush1.msra.mxu0 %v1979
    %2012 = vmatprep.subr.mxu0 0.0
    %2013 = vmatpush1.msra.mxu0 %v1978
    %2014 = vmatprep.subr.mxu0 0.0
    %2015 = vmatpush1.msra.mxu0 %v1977
    %2016 = vmatprep.subr.mxu0 0.0
    %2017 = vmatpush1.msra.mxu0 %v1976
    %2018 = vmatprep.subr.mxu0 0.0
    %2019 = vmatpush1.msra.mxu0 %v1975
    %2020 = vmatprep.subr.mxu0 0.0
    %2021 = vmatpush1.msra.mxu0 %v1974
    %2022 = vmatprep.subr.mxu0 0.0
    %2023 = vmatpush1.msra.mxu0 %v1973
    %2024 = vmatprep.subr.mxu0 0.0
    %2025 = vmatpush1.msra.mxu0 %v1972
    %2026 = vmatprep.subr.mxu0 0.0
    %2027 = vmatpush2.msra.mxu0 0.0
    %2028 = vmatprep.subr.mxu0 0.0
    %2029 = vmatpush2.msra.mxu0 0.0
    %2030 = vmatprep.subr.mxu0 0.0
    %2031 = vmatpush2.msra.mxu0 0.0
    %2032 = vmatprep.subr.mxu0 0.0
    %2033 = vmatpush2.msra.mxu0 0.0
    %2034 = vmatprep.subr.mxu0 0.0
    %2035 = vmatpush2.msra.mxu0 0.0
    %2036 = vmatprep.subr.mxu0 0.0
    %2037 = vmatpush2.msra.mxu0 0.0
    %2038 = vmatprep.subr.mxu0 0.0
    %2039 = vmatpush2.msra.mxu0 0.0
    %2040 = vmatprep.subr.mxu0 0.0
    %2041 = vmatpush2.msra.mxu0 0.0
    %2042 = vmatprep.subr.mxu0 0.0
    %2043 = vmatpush2.msra.mxu0 0.0
    %2044 = vmatprep.subr.mxu0 0.0
    %2045 = vmatpush2.msra.mxu0 0.0
    %2046 = vmatprep.subr.mxu0 0.0
    %2047 = vmatpush2.msra.mxu0 0.0
    %2048 = vmatprep.subr.mxu0 0.0
    %2049 = vmatpush2.msra.mxu0 0.0
    %2050 = vmatprep.subr.mxu0 0.0
    %2051 = vmatpush2.msra.mxu0 0.0
    %2052 = vmatprep.subr.mxu0 0.0
    %2053 = vmatpush2.msra.mxu0 0.0
    %2054 = vmatprep.subr.mxu0 0.0
    %2055 = vmatpush2.msra.mxu0 0.0
    %2056 = vmatprep.subr.mxu0 0.0
    %2057 = vmatpush2.msra.mxu0 0.0
    %2058 = vmatprep.mubr.f32.mxu0 0.0
    %2059 = vmatmul.mubr.f32.gmra.mxu0 %v1989
    %v2060 = vpop.f32.mrf.mxu0
    %v2061 = vadd.f32 %v1985, %v2060
    %v2062 = vpop.f32.mrf.mxu0
    %2063 = vmatprep.mubr.f32.mxu0 0.0
    %2064 = vmatmul.mubr.f32.gmra.mxu0 %v1992
    %v2065 = vpop.f32.mrf.mxu0
    %v2066 = vadd.f32 %v1985, %v2065
    %v2067 = vpop.f32.mrf.mxu0
    %2068 = vdwg.mxu0
    %v2069 = vadd.f32 %v1860, %v2061
    %v2070 = vadd.f32 %v1861, %v2066
    %v2071 = vld [vmem:[%s12] sm:$0x1]
    %v2072 = vld [vmem:[%s13] sm:$0x1]
    %v2073 = vsel %vm61, %v2069, 0.0
    %2074 = vadd.xlane.f32.xlu0 %v2073
    %v2075 = vpop.xlane.xlu0 %2074
    %v2076 = vsel %vm61, %v2070, 0.0
    %2077 = vadd.xlane.f32.xlu0 %v2076
    %v2078 = vpop.xlane.xlu0 %2077
    %v2079 = vmul.f32 %v2075, %v1825
    %v2080 = vmul.f32 %v2078, %v1825
    %v2081 = vsub.f32 %v2069, %v2079
    %v2082 = vsub.f32 %v2070, %v2080
    %v2083 = vmul.f32 %v2081, %v2081
    %v2084 = vmul.f32 %v2082, %v2082
    %v2085 = vsel %vm61, %v2083, 0.0
    %2086 = vadd.xlane.f32.xlu0 %v2085
    %v2087 = vpop.xlane.xlu0 %2086
    %v2088 = vsel %vm61, %v2084, 0.0
    %2089 = vadd.xlane.f32.xlu0 %v2088
    %v2090 = vpop.xlane.xlu0 %2089
    %v2091 = vmul.f32 %v2087, %v1825
    %v2092 = vmul.f32 %v2090, %v1825
    %v2093 = vadd.f32 %v2091, 1e-05
    %v2094 = vadd.f32 %v2092, 1e-05
    %v2095 = vrsqrt.pop %v2093
    %v2096 = vrsqrt.pop %v2094
    %v2097 = vmul.f32 %v2081, %v2095
    %v2098 = vmul.f32 %v2082, %v2096
    %v2100 = vlaneseq
    %v2101 = vshrl.u32 %v2100, 7
    %v2102 = vsub.s32 0, %v2101
    %v2103 = vrot.slane %v2071, %v2102
    %v2105 = vmul.f32 %v2097, %v2103
    %v2106 = vmul.f32 %v2098, %v2103
    %v2108 = vlaneseq
    %v2109 = vshrl.u32 %v2108, 7
    %v2110 = vsub.s32 0, %v2109
    %v2111 = vrot.slane %v2072, %v2110
    %v2113 = vadd.f32 %v2105, %v2111
    %v2114 = vadd.f32 %v2106, %v2111
    %2115 = vst.msk [vmem:[#allocation2] sm:$0xff] %vm61, %v2113
    %2116 = vst.msk [vmem:[#allocation2 + $0x8] sm:$0xff] %vm61, %v2114
    // Predicated region
    $region58: #{transformer_block.1} parent=1 // pred_check
      _
    $region59: #{transformer_block.1} parent=1 // pred_check_branch
      %2118 = sbr.rel (0) target = $region61
    $region60: #{transformer_block.1} parent=1 // pred_region
      %s2120 = ssub.s32 256, 256
      %2121 = vsyncadd [#allocation3], %s2120
      %s2122 = sshll.u32 [#allocation2], 4
      %s2123 = int_to_ptr.vmem [resolvable:$true] %s2122
      %2128 = dma.vmem_to_hbm [thread:$0]  %s2123, 256, %s14, [#allocation3], 128, 128, 8
    $region61: #{transformer_block.1} parent=1 // pred_fallthru
      _
    // Predicated region
    $region62: #{transformer_block.1} parent=1 // pred_check
      _
    $region63: #{transformer_block.1} parent=1 // pred_check_branch
      %2130 = sbr.rel (0) target = $region65
    $region64: #{transformer_block.1} parent=1 // pred_region
      %2131 = dma.done [#allocation3], 256
    $region65: #{transformer_block.1} parent=1 // pred_fallthru
      _
    %2132 = vsyncpa [#allocation3], 1

</llo_original>
